<compile_context>
chip_gen: v7x
topology: tpu7x:2x2x1
jax: 0.10.0
libtpu: 0.0.40
codegen_flags: <defaults>
</compile_context>

<pallas_src>
from functools import partial

import jax
import jax.numpy as jnp
from jax.experimental import pallas as pl
from jax.experimental.pallas import tpu as pltpu


# ----------------------------------------------------------------------------
# Elementwise helpers (pure jnp; `recip` lets the kernel route divides to the
# EUP via pl.reciprocal while the plain-JAX reference uses exact division).
# ----------------------------------------------------------------------------
def _erf(x, recip=None):
    # Abramowitz & Stegun 7.1.26 polynomial approximation, |err| < 1.5e-7.
    a1, a2, a3, a4, a5 = 0.254829592, -0.284496736, 1.421413741, -1.453152027, 1.061405429
    p = 0.3275911
    sgn = jnp.where(x < 0.0, -1.0, 1.0)
    ax = jnp.abs(x)
    den = 1.0 + p * ax
    t = recip(den) if recip is not None else 1.0 / den
    poly = ((((a5 * t + a4) * t + a3) * t + a2) * t + a1) * t
    return sgn * (1.0 - poly * jnp.exp(-ax * ax))


def _gelu(x, recip=None):
    # Exact (erf-based) GELU, matching torch.nn.GELU(approximate='none').
    return 0.5 * x * (1.0 + _erf(x * 0.7071067811865476, recip))


# ----------------------------------------------------------------------------
# Pallas kernel: one batch element per grid step.
# ----------------------------------------------------------------------------
def mbconv_kernel(xds_ref, xee_ref, xeo_ref, xoe_ref,
                  wa_ref, ba_ref, wdw_ref, bdw_ref,
                  w1_ref, b1_ref, w2_ref, b2_ref,
                  wb_ref, wp_ref, bo_ref,
                  out_ref,
                  dwpad_ref):
    f32 = jnp.float32
    _, Ho, Wo, Cin = xds_ref.shape
    Cmid = wa_ref.shape[1]
    HoWo = Ho * Wo

    def recip(v):
        return pl.reciprocal(v, approx=True)

    # ---- main branch: conv_a (1x1, stride 2) with pre_norm + BN pre-folded, + GELU
    x11 = xds_ref[0]                                               # (Ho,Wo,Cin); also pool centre
    a2 = jnp.dot(x11.reshape(HoWo, Cin), wa_ref[...],
                 preferred_element_type=f32) + ba_ref[...]         # (HoWo,Cmid)
    a2 = _gelu(a2, recip)
    a3 = a2.reshape(Ho, Wo, Cmid)

    # ---- depthwise 3x3 conv (stride 1, pad 1); BN scale folded into the taps.
    # Halo scratch: zero only the 1-pixel border, overwrite the interior.
    zrow = jnp.zeros((Wo + 2, Cmid), f32)
    zcol = jnp.zeros((Ho + 2, 1, Cmid), f32)
    dwpad_ref[0] = zrow
    dwpad_ref[Ho + 1] = zrow
    dwpad_ref[:, 0:1, :] = zcol
    dwpad_ref[:, Wo + 1:Wo + 2, :] = zcol
    dwpad_ref[1:Ho + 1, 1:Wo + 1, :] = a3

    w_dw = wdw_ref[...]                                            # (9,Cmid), dn_s pre-folded
    d3 = w_dw[4:5, :].reshape(1, 1, Cmid) * a3                     # centre tap from registers
    for ky in range(3):
        for kx in range(3):
            if ky == 1 and kx == 1:
                continue
            k = ky * 3 + kx
            tap = w_dw[k:k + 1, :].reshape(1, 1, Cmid)
            d3 = d3 + tap * dwpad_ref[ky:ky + Ho, kx:kx + Wo, :]
    d2 = _gelu(d3.reshape(HoWo, Cmid) + bdw_ref[...], recip)       # (HoWo,Cmid)

    # ---- squeeze & excitation
    pooled = jnp.mean(d2, axis=0, keepdims=True)                   # (1,Cmid)
    h = _gelu(jnp.dot(pooled, w1_ref[...], preferred_element_type=f32) + b1_ref[...], recip)
    g = jnp.dot(h, w2_ref[...], preferred_element_type=f32) + b2_ref[...]
    gate = recip(1.0 + jnp.exp(-g))                                # sigmoid via EUP reciprocal
    se = d2 * gate                                                 # (HoWo,Cmid)

    # ---- projection branch: MaxPool2d(3, s=2, p=1) from shifted even/odd slabs
    p00 = xee_ref[0, 0:Ho, 0:Wo, :]
    p01 = xeo_ref[0, 0:Ho, 0:Wo, :]
    p02 = xee_ref[0, 0:Ho, 1:Wo + 1, :]
    p10 = xoe_ref[0, 0:Ho, 0:Wo, :]
    p12 = xoe_ref[0, 0:Ho, 1:Wo + 1, :]
    p20 = xee_ref[0, 1:Ho + 1, 0:Wo, :]
    p21 = xeo_ref[0, 1:Ho + 1, 0:Wo, :]
    p22 = xee_ref[0, 1:Ho + 1, 1:Wo + 1, :]
    m0 = jnp.maximum(p00, p01)
    m1 = jnp.maximum(p02, p10)
    m2 = jnp.maximum(x11, p12)                                     # x11 is the (1,1) window element
    m3 = jnp.maximum(p20, p21)
    pool = jnp.maximum(jnp.maximum(jnp.maximum(m0, m1), jnp.maximum(m2, m3)), p22)
    pool2 = pool.reshape(HoWo, Cin)

    # ---- conv_b + projection conv (biases pre-summed) + fused residual add
    out_ref[0] = (jnp.dot(se, wb_ref[...], preferred_element_type=f32)
                  + jnp.dot(pool2, wp_ref[...], preferred_element_type=f32)
                  + bo_ref[...])


# ----------------------------------------------------------------------------
# Wrapper: NCHW in / NCHW out, BN folding + layout glue + pallas_call.
# ----------------------------------------------------------------------------
@partial(jax.jit, static_argnames=("stride",))
def mbconv_forward(x_nchw, params, *, stride=2):
    # This synthetic kernel implements the projection (stride=2, Cin!=Cout) config.
    assert stride == 2
    N, Cin, H, W = x_nchw.shape
    Ho = (H - 1) // stride + 1
    Wo = (W - 1) // stride + 1
    Cmid = params["wa"].shape[1]
    Cout = params["wb"].shape[1]

    x = jnp.transpose(x_nchw, (0, 2, 3, 1)).astype(jnp.float32)    # NHWC

    # stride-2 downsample feeding conv_a; it is also the centre element of every
    # 3x3/stride-2 max-pool window, so it is shared with the projection branch.
    x_ds = x[:, ::stride, ::stride, :]                             # (N,Ho,Wo,Cin)

    # even/odd decomposition of the (-inf)-padded input: every pool window
    # becomes a plain shifted slice in-kernel (no 9x data duplication).
    xpad = jnp.pad(x, ((0, 0), (1, 1), (1, 1), (0, 0)), constant_values=-jnp.inf)
    x_ee = xpad[:, 0::2, 0::2, :][:, :Ho + 1, :Wo + 1, :]          # even rows, even cols
    x_eo = xpad[:, 0::2, 1::2, :][:, :Ho + 1, :Wo, :]              # even rows, odd  cols
    x_oe = xpad[:, 1::2, 0::2, :][:, :Ho, :Wo + 1, :]              # odd  rows, even cols

    # ---- fold BN affines / biases into the conv weights (exact, wrapper-side)
    pn_s, pn_b = params["pn_s"], params["pn_b"]                    # (1,Cin)
    an_s, an_b = params["an_s"], params["an_b"]                    # (1,Cmid)
    dn_s, dn_b = params["dn_s"], params["dn_b"]                    # (1,Cmid)
    wa_f = (pn_s.reshape(Cin, 1) * params["wa"]) * an_s            # (Cin,Cmid)
    ba_f = jnp.dot(pn_b, params["wa"]) * an_s + an_b               # (1,Cmid)
    wdw_f = params["wdw"] * dn_s                                   # (9,Cmid)
    bdw_f = dn_b                                                   # (1,Cmid)
    bo_f = params["bb"] + params["bp"]                             # (1,Cout)

    p_args = [wa_f, ba_f, wdw_f, bdw_f,
              params["w1"], params["b1"], params["w2"], params["b2"],
              params["wb"], params["wp"], bo_f]

    def rep_spec(arr):
        zeros = (0,) * arr.ndim
        return pl.BlockSpec(arr.shape, lambda n, z=zeros: z)

    in_specs = [
        pl.BlockSpec((1, Ho, Wo, Cin), lambda n: (n, 0, 0, 0)),
        pl.BlockSpec((1, Ho + 1, Wo + 1, Cin), lambda n: (n, 0, 0, 0)),
        pl.BlockSpec((1, Ho + 1, Wo, Cin), lambda n: (n, 0, 0, 0)),
        pl.BlockSpec((1, Ho, Wo + 1, Cin), lambda n: (n, 0, 0, 0)),
    ] + [rep_spec(a) for a in p_args]

    out_flat = pl.pallas_call(
        mbconv_kernel,
        out_shape=jax.ShapeDtypeStruct((N, Ho * Wo, Cout), jnp.float32),
        grid=(N,),
        in_specs=in_specs,
        out_specs=pl.BlockSpec((1, Ho * Wo, Cout), lambda n: (n, 0, 0)),
        scratch_shapes=[pltpu.VMEM((Ho + 2, Wo + 2, Cmid), jnp.float32)],
        compiler_params=pltpu.CompilerParams(dimension_semantics=("parallel",)),
    )(x_ds, x_ee, x_eo, x_oe, *p_args)

    out_nhwc = out_flat.reshape(N, Ho, Wo, Cout)
    return jnp.transpose(out_nhwc, (0, 3, 1, 2))                   # back to NCHW


# ----------------------------------------------------------------------------
# Deterministic synthetic parameter initialization (shapes follow __init__).
# ----------------------------------------------------------------------------
def init_params(key, Cin, Cmid, Csqz, Cout, eps=1e-5):
    ks = jax.random.split(key, 24)
    ki = iter(ks)

    def bn_fold(C):
        gamma = 1.0 + 0.1 * jax.random.normal(next(ki), (C,), jnp.float32)
        beta = 0.1 * jax.random.normal(next(ki), (C,), jnp.float32)
        rmean = 0.1 * jax.random.normal(next(ki), (C,), jnp.float32)
        rvar = jax.random.uniform(next(ki), (C,), jnp.float32, 0.5, 1.5)
        s = gamma / jnp.sqrt(rvar + eps)
        b = beta - rmean * s
        return s.reshape(1, C), b.reshape(1, C)

    pn_s, pn_b = bn_fold(Cin)     # pre_norm
    an_s, an_b = bn_fold(Cmid)    # conv_a BN
    dn_s, dn_b = bn_fold(Cmid)    # depthwise BN

    def w(shape, scale=0.1):
        return scale * jax.random.normal(next(ki), shape, jnp.float32)

    return {
        "pn_s": pn_s, "pn_b": pn_b,
        "wa": w((Cin, Cmid)), "an_s": an_s, "an_b": an_b,      # conv_a (1x1, no bias)
        "wdw": w((9, Cmid)), "dn_s": dn_s, "dn_b": dn_b,       # depthwise 3x3 (no bias)
        "w1": w((Cmid, Csqz)), "b1": w((1, Csqz), 0.05),       # SE fc1
        "w2": w((Csqz, Cmid)), "b2": w((1, Cmid), 0.05),       # SE fc2
        "wb": w((Cmid, Cout)), "bb": w((1, Cout), 0.05),       # conv_b
        "wp": w((Cin, Cout)), "bp": w((1, Cout), 0.05),        # proj 1x1 conv
    }


# ----------------------------------------------------------------------------
# Plain-JAX reference of the same math with UNFOLDED params (sanity check).
# ----------------------------------------------------------------------------
def mbconv_reference(x_nchw, p, *, stride=2):
    x = jnp.transpose(x_nchw, (0, 2, 3, 1)).astype(jnp.float32)
    N, H, W, Cin = x.shape
    Ho = (H - 1) // stride + 1
    Wo = (W - 1) // stride + 1

    def c(v):
        return v.reshape(1, 1, 1, -1)

    xpad = jnp.pad(x, ((0, 0), (1, 1), (1, 1), (0, 0)), constant_values=-jnp.inf)
    pool = jnp.max(jnp.stack(
        [xpad[:, ky:ky + stride * Ho:stride, kx:kx + stride * Wo:stride, :]
         for ky in range(3) for kx in range(3)], 0), axis=0)
    res = jnp.einsum("nhwc,co->nhwo", pool, p["wp"]) + c(p["bp"])

    xb = x[:, ::stride, ::stride, :] * c(p["pn_s"]) + c(p["pn_b"])
    a = _gelu(jnp.einsum("nhwc,cm->nhwm", xb, p["wa"]) * c(p["an_s"]) + c(p["an_b"]))
    apad = jnp.pad(a, ((0, 0), (1, 1), (1, 1), (0, 0)))
    d = sum(c(p["wdw"][ky * 3 + kx]) * apad[:, ky:ky + Ho, kx:kx + Wo, :]
            for ky in range(3) for kx in range(3))
    d = _gelu(d * c(p["dn_s"]) + c(p["dn_b"]))
    pooled = jnp.mean(d, axis=(1, 2), keepdims=True)
    h = _gelu(jnp.einsum("nijc,cs->nijs", pooled, p["w1"]) + c(p["b1"]))
    gate = jax.nn.sigmoid(jnp.einsum("nijs,sc->nijc", h, p["w2"]) + c(p["b2"]))
    main = jnp.einsum("nhwc,co->nhwo", d * gate, p["wb"]) + c(p["bb"])
    return jnp.transpose(res + main, (0, 3, 1, 2))


# ----------------------------------------------------------------------------
if __name__ == "__main__":
    key = jax.random.PRNGKey(0)
    kx, kp = jax.random.split(key)

    # MBConv(image_size=(16,16), in=4, out=8, expand_ratio=4, se_ratio=0.25, stride=2)
    N, Cin, H, W = 2, 4, 16, 16
    expand_ratio, se_ratio, stride, Cout = 4, 0.25, 2, 8
    Cmid = int(Cin * expand_ratio)            # 16
    Csqz = max(1, int(Cmid * se_ratio))       # 4

    x = jax.random.normal(kx, (N, Cin, H, W), dtype=jnp.float32)
    params = init_params(kp, Cin, Cmid, Csqz, Cout)

    out = mbconv_forward(x, params, stride=stride)
    out = jax.block_until_ready(out)

    assert out.shape == (N, Cout, (H - 1) // stride + 1, (W - 1) // stride + 1)
    ref = mbconv_reference(x, params, stride=stride)
    assert bool(jnp.allclose(out, ref, rtol=1e-2, atol=1e-2)), \
        float(jnp.max(jnp.abs(out - ref)))

    print("KERNEL_OK")
</pallas_src>

<mosaic_0001>
module attributes {stable_mosaic.version = 11 : i64} {
  func.func @mbconv_kernel(%arg0: i32, %arg1: memref<1x8x8x4xf32, #tpu.memory_space<vmem>>, %arg2: memref<1x9x9x4xf32, #tpu.memory_space<vmem>>, %arg3: memref<1x9x8x4xf32, #tpu.memory_space<vmem>>, %arg4: memref<1x8x9x4xf32, #tpu.memory_space<vmem>>, %arg5: memref<4x16xf32, #tpu.memory_space<vmem>>, %arg6: memref<1x16xf32, #tpu.memory_space<vmem>>, %arg7: memref<9x16xf32, #tpu.memory_space<vmem>>, %arg8: memref<1x16xf32, #tpu.memory_space<vmem>>, %arg9: memref<16x4xf32, #tpu.memory_space<vmem>>, %arg10: memref<1x4xf32, #tpu.memory_space<vmem>>, %arg11: memref<4x16xf32, #tpu.memory_space<vmem>>, %arg12: memref<1x16xf32, #tpu.memory_space<vmem>>, %arg13: memref<16x8xf32, #tpu.memory_space<vmem>>, %arg14: memref<4x8xf32, #tpu.memory_space<vmem>>, %arg15: memref<1x8xf32, #tpu.memory_space<vmem>>, %arg16: memref<1x64x8xf32, #tpu.memory_space<vmem>>, %arg17: memref<10x10x16xf32, #tpu.memory_space<vmem>>) attributes {dimension_semantics = [#tpu.dimension_semantics<parallel>], iteration_bounds = array<i64: 2>, scalar_prefetch = 0 : i64, scratch_operands = 1 : i64, tpu.core_type = #tpu.core_type<tc>, window_params = [{transform_indices = @transform_0, window_bounds = array<i64: 1, 8, 8, 4>}, {transform_indices = @transform_1, window_bounds = array<i64: 1, 9, 9, 4>}, {transform_indices = @transform_2, window_bounds = array<i64: 1, 9, 8, 4>}, {transform_indices = @transform_3, window_bounds = array<i64: 1, 8, 9, 4>}, {pipeline_mode = #tpu.pipeline_mode<synchronous>, transform_indices = @transform_4, window_bounds = array<i64: 4, 16>}, {pipeline_mode = #tpu.pipeline_mode<synchronous>, transform_indices = @transform_5, window_bounds = array<i64: 1, 16>}, {pipeline_mode = #tpu.pipeline_mode<synchronous>, transform_indices = @transform_6, window_bounds = array<i64: 9, 16>}, {pipeline_mode = #tpu.pipeline_mode<synchronous>, transform_indices = @transform_7, window_bounds = array<i64: 1, 16>}, {pipeline_mode = #tpu.pipeline_mode<synchronous>, transform_indices = @transform_8, window_bounds = array<i64: 16, 4>}, {pipeline_mode = #tpu.pipeline_mode<synchronous>, transform_indices = @transform_9, window_bounds = array<i64: 1, 4>}, {pipeline_mode = #tpu.pipeline_mode<synchronous>, transform_indices = @transform_10, window_bounds = array<i64: 4, 16>}, {pipeline_mode = #tpu.pipeline_mode<synchronous>, transform_indices = @transform_11, window_bounds = array<i64: 1, 16>}, {pipeline_mode = #tpu.pipeline_mode<synchronous>, transform_indices = @transform_12, window_bounds = array<i64: 16, 8>}, {pipeline_mode = #tpu.pipeline_mode<synchronous>, transform_indices = @transform_13, window_bounds = array<i64: 4, 8>}, {pipeline_mode = #tpu.pipeline_mode<synchronous>, transform_indices = @transform_14, window_bounds = array<i64: 1, 8>}, {transform_indices = @transform_15, window_bounds = array<i64: 1, 64, 8>}]} {
    %c0 = arith.constant 0 : index
    %c0_0 = arith.constant 0 : index
    %c0_1 = arith.constant 0 : index
    %c0_2 = arith.constant 0 : index
    %0 = vector.load %arg1[%c0, %c0_0, %c0_1, %c0_2] : memref<1x8x8x4xf32, #tpu.memory_space<vmem>>, vector<1x8x8x4xf32>
    %1 = vector.shape_cast %0 : vector<1x8x8x4xf32> to vector<8x8x4xf32>
    %2 = vector.shape_cast %1 : vector<8x8x4xf32> to vector<64x4xf32>
    %c0_3 = arith.constant 0 : index
    %c0_4 = arith.constant 0 : index
    %3 = vector.load %arg5[%c0_3, %c0_4] : memref<4x16xf32, #tpu.memory_space<vmem>>, vector<4x16xf32>
    %cst = arith.constant dense<0.000000e+00> : vector<64x16xf32>
    %4 = tpu.matmul %2, %3, %cst {dimension_numbers = #tpu.dot_dimension_numbers<[1], [0], [0], [1], [0, 0, 1, 1], [], []>} : vector<64x4xf32>, vector<4x16xf32>, vector<64x16xf32> -> vector<64x16xf32>
    %c0_5 = arith.constant 0 : index
    %c0_6 = arith.constant 0 : index
    %5 = vector.load %arg6[%c0_5, %c0_6] : memref<1x16xf32, #tpu.memory_space<vmem>>, vector<1x16xf32>
    %6 = vector.broadcast %5 : vector<1x16xf32> to vector<64x16xf32>
    %7 = arith.addf %4, %6 : vector<64x16xf32>
    %cst_7 = arith.constant 5.000000e-01 : f32
    %8 = vector.broadcast %cst_7 : f32 to vector<64x16xf32>
    %9 = arith.mulf %8, %7 : vector<64x16xf32>
    %cst_8 = arith.constant 0.707106769 : f32
    %10 = vector.broadcast %cst_8 : f32 to vector<64x16xf32>
    %11 = arith.mulf %7, %10 : vector<64x16xf32>
    %cst_9 = arith.constant 0.000000e+00 : f32
    %12 = vector.broadcast %cst_9 : f32 to vector<64x16xf32>
    %13 = arith.cmpf olt, %11, %12 : vector<64x16xf32>
    %cst_10 = arith.constant -1.000000e+00 : f32
    %cst_11 = arith.constant 1.000000e+00 : f32
    %14 = vector.broadcast %cst_10 : f32 to vector<64x16xf32>
    %15 = vector.broadcast %cst_11 : f32 to vector<64x16xf32>
    %16 = arith.select %13, %14, %15 : vector<64x16xi1>, vector<64x16xf32>
    %17 = math.absf %11 : vector<64x16xf32>
    %cst_12 = arith.constant 0.327591091 : f32
    %18 = vector.broadcast %cst_12 : f32 to vector<64x16xf32>
    %19 = arith.mulf %18, %17 : vector<64x16xf32>
    %cst_13 = arith.constant 1.000000e+00 : f32
    %20 = vector.broadcast %cst_13 : f32 to vector<64x16xf32>
    %21 = arith.addf %20, %19 : vector<64x16xf32>
    %22 = tpu.reciprocal %21 {approx = true} : vector<64x16xf32> -> vector<64x16xf32>
    %cst_14 = arith.constant 1.06140542 : f32
    %23 = vector.broadcast %cst_14 : f32 to vector<64x16xf32>
    %24 = arith.mulf %23, %22 : vector<64x16xf32>
    %cst_15 = arith.constant -1.45315206 : f32
    %25 = vector.broadcast %cst_15 : f32 to vector<64x16xf32>
    %26 = arith.addf %24, %25 : vector<64x16xf32>
    %27 = arith.mulf %26, %22 : vector<64x16xf32>
    %cst_16 = arith.constant 1.42141378 : f32
    %28 = vector.broadcast %cst_16 : f32 to vector<64x16xf32>
    %29 = arith.addf %27, %28 : vector<64x16xf32>
    %30 = arith.mulf %29, %22 : vector<64x16xf32>
    %cst_17 = arith.constant -0.284496725 : f32
    %31 = vector.broadcast %cst_17 : f32 to vector<64x16xf32>
    %32 = arith.addf %30, %31 : vector<64x16xf32>
    %33 = arith.mulf %32, %22 : vector<64x16xf32>
    %cst_18 = arith.constant 0.254829586 : f32
    %34 = vector.broadcast %cst_18 : f32 to vector<64x16xf32>
    %35 = arith.addf %33, %34 : vector<64x16xf32>
    %36 = arith.mulf %35, %22 : vector<64x16xf32>
    %cst_19 = arith.constant 0.000000e+00 : f32
    %37 = vector.broadcast %cst_19 : f32 to vector<64x16xf32>
    %38 = arith.subf %37, %17 : vector<64x16xf32>
    %39 = arith.mulf %38, %17 : vector<64x16xf32>
    %40 = math.exp %39 : vector<64x16xf32>
    %41 = arith.mulf %36, %40 : vector<64x16xf32>
    %cst_20 = arith.constant 1.000000e+00 : f32
    %42 = vector.broadcast %cst_20 : f32 to vector<64x16xf32>
    %43 = arith.subf %42, %41 : vector<64x16xf32>
    %44 = arith.mulf %16, %43 : vector<64x16xf32>
    %cst_21 = arith.constant 1.000000e+00 : f32
    %45 = vector.broadcast %cst_21 : f32 to vector<64x16xf32>
    %46 = arith.addf %45, %44 : vector<64x16xf32>
    %47 = arith.mulf %9, %46 : vector<64x16xf32>
    %48 = vector.shape_cast %47 : vector<64x16xf32> to vector<8x8x16xf32>
    %cst_22 = arith.constant 0.000000e+00 : f32
    %49 = vector.broadcast %cst_22 : f32 to vector<10x16xf32>
    %cst_23 = arith.constant 0.000000e+00 : f32
    %50 = vector.broadcast %cst_23 : f32 to vector<10x1x16xf32>
    %c0_24 = arith.constant 0 : index
    %c0_25 = arith.constant 0 : index
    %c0_26 = arith.constant 0 : index
    %51 = vector.load %arg17[%c0_24, %c0_25, %c0_26] : memref<10x10x16xf32, #tpu.memory_space<vmem>>, vector<1x10x16xf32>
    %52 = vector.shape_cast %51 : vector<1x10x16xf32> to vector<10x16xf32>
    %53 = vector.shape_cast %49 : vector<10x16xf32> to vector<1x10x16xf32>
    tpu.vector_store %arg17[%c0_24, %c0_25, %c0_26], %53 {strides = array<i32>} : memref<10x10x16xf32, #tpu.memory_space<vmem>>, vector<1x10x16xf32>,
    %c9 = arith.constant 9 : index
    %c0_27 = arith.constant 0 : index
    %c0_28 = arith.constant 0 : index
    %54 = vector.load %arg17[%c9, %c0_27, %c0_28] : memref<10x10x16xf32, #tpu.memory_space<vmem>>, vector<1x10x16xf32>
    %55 = vector.shape_cast %54 : vector<1x10x16xf32> to vector<10x16xf32>
    %56 = vector.shape_cast %49 : vector<10x16xf32> to vector<1x10x16xf32>
    tpu.vector_store %arg17[%c9, %c0_27, %c0_28], %56 {strides = array<i32>} : memref<10x10x16xf32, #tpu.memory_space<vmem>>, vector<1x10x16xf32>,
    %c0_29 = arith.constant 0 : index
    %c0_30 = arith.constant 0 : index
    %c0_31 = arith.constant 0 : index
    %57 = vector.load %arg17[%c0_29, %c0_30, %c0_31] : memref<10x10x16xf32, #tpu.memory_space<vmem>>, vector<10x1x16xf32>
    tpu.vector_store %arg17[%c0_29, %c0_30, %c0_31], %50 {strides = array<i32>} : memref<10x10x16xf32, #tpu.memory_space<vmem>>, vector<10x1x16xf32>,
    %c0_32 = arith.constant 0 : index
    %c9_33 = arith.constant 9 : index
    %c0_34 = arith.constant 0 : index
    %58 = vector.load %arg17[%c0_32, %c9_33, %c0_34] : memref<10x10x16xf32, #tpu.memory_space<vmem>>, vector<10x1x16xf32>
    tpu.vector_store %arg17[%c0_32, %c9_33, %c0_34], %50 {strides = array<i32>} : memref<10x10x16xf32, #tpu.memory_space<vmem>>, vector<10x1x16xf32>,
    %c1 = arith.constant 1 : index
    %c1_35 = arith.constant 1 : index
    %c0_36 = arith.constant 0 : index
    %59 = vector.load %arg17[%c1, %c1_35, %c0_36] : memref<10x10x16xf32, #tpu.memory_space<vmem>>, vector<8x8x16xf32>
    tpu.vector_store %arg17[%c1, %c1_35, %c0_36], %48 {strides = array<i32>} : memref<10x10x16xf32, #tpu.memory_space<vmem>>, vector<8x8x16xf32>,
    %c0_37 = arith.constant 0 : index
    %c0_38 = arith.constant 0 : index
    %60 = vector.load %arg7[%c0_37, %c0_38] : memref<9x16xf32, #tpu.memory_space<vmem>>, vector<9x16xf32>
    %61 = vector.extract_strided_slice %60 {offsets = [4, 0], sizes = [1, 16], strides = [1, 1]} : vector<9x16xf32> to vector<1x16xf32>
    %62 = vector.shape_cast %61 : vector<1x16xf32> to vector<1x1x16xf32>
    %63 = vector.broadcast %62 : vector<1x1x16xf32> to vector<8x8x16xf32>
    %64 = arith.mulf %63, %48 : vector<8x8x16xf32>
    %65 = vector.extract_strided_slice %60 {offsets = [0, 0], sizes = [1, 16], strides = [1, 1]} : vector<9x16xf32> to vector<1x16xf32>
    %66 = vector.shape_cast %65 : vector<1x16xf32> to vector<1x1x16xf32>
    %c0_39 = arith.constant 0 : index
    %c0_40 = arith.constant 0 : index
    %c0_41 = arith.constant 0 : index
    %67 = vector.load %arg17[%c0_39, %c0_40, %c0_41] : memref<10x10x16xf32, #tpu.memory_space<vmem>>, vector<8x8x16xf32>
    %68 = vector.broadcast %66 : vector<1x1x16xf32> to vector<8x8x16xf32>
    %69 = arith.mulf %68, %67 : vector<8x8x16xf32>
    %70 = arith.addf %64, %69 : vector<8x8x16xf32>
    %71 = vector.extract_strided_slice %60 {offsets = [1, 0], sizes = [1, 16], strides = [1, 1]} : vector<9x16xf32> to vector<1x16xf32>
    %72 = vector.shape_cast %71 : vector<1x16xf32> to vector<1x1x16xf32>
    %c0_42 = arith.constant 0 : index
    %c1_43 = arith.constant 1 : index
    %c0_44 = arith.constant 0 : index
    %73 = vector.load %arg17[%c0_42, %c1_43, %c0_44] : memref<10x10x16xf32, #tpu.memory_space<vmem>>, vector<8x8x16xf32>
    %74 = vector.broadcast %72 : vector<1x1x16xf32> to vector<8x8x16xf32>
    %75 = arith.mulf %74, %73 : vector<8x8x16xf32>
    %76 = arith.addf %70, %75 : vector<8x8x16xf32>
    %77 = vector.extract_strided_slice %60 {offsets = [2, 0], sizes = [1, 16], strides = [1, 1]} : vector<9x16xf32> to vector<1x16xf32>
    %78 = vector.shape_cast %77 : vector<1x16xf32> to vector<1x1x16xf32>
    %c0_45 = arith.constant 0 : index
    %c2 = arith.constant 2 : index
    %c0_46 = arith.constant 0 : index
    %79 = vector.load %arg17[%c0_45, %c2, %c0_46] : memref<10x10x16xf32, #tpu.memory_space<vmem>>, vector<8x8x16xf32>
    %80 = vector.broadcast %78 : vector<1x1x16xf32> to vector<8x8x16xf32>
    %81 = arith.mulf %80, %79 : vector<8x8x16xf32>
    %82 = arith.addf %76, %81 : vector<8x8x16xf32>
    %83 = vector.extract_strided_slice %60 {offsets = [3, 0], sizes = [1, 16], strides = [1, 1]} : vector<9x16xf32> to vector<1x16xf32>
    %84 = vector.shape_cast %83 : vector<1x16xf32> to vector<1x1x16xf32>
    %c1_47 = arith.constant 1 : index
    %c0_48 = arith.constant 0 : index
    %c0_49 = arith.constant 0 : index
    %85 = vector.load %arg17[%c1_47, %c0_48, %c0_49] : memref<10x10x16xf32, #tpu.memory_space<vmem>>, vector<8x8x16xf32>
    %86 = vector.broadcast %84 : vector<1x1x16xf32> to vector<8x8x16xf32>
    %87 = arith.mulf %86, %85 : vector<8x8x16xf32>
    %88 = arith.addf %82, %87 : vector<8x8x16xf32>
    %89 = vector.extract_strided_slice %60 {offsets = [5, 0], sizes = [1, 16], strides = [1, 1]} : vector<9x16xf32> to vector<1x16xf32>
    %90 = vector.shape_cast %89 : vector<1x16xf32> to vector<1x1x16xf32>
    %c1_50 = arith.constant 1 : index
    %c2_51 = arith.constant 2 : index
    %c0_52 = arith.constant 0 : index
    %91 = vector.load %arg17[%c1_50, %c2_51, %c0_52] : memref<10x10x16xf32, #tpu.memory_space<vmem>>, vector<8x8x16xf32>
    %92 = vector.broadcast %90 : vector<1x1x16xf32> to vector<8x8x16xf32>
    %93 = arith.mulf %92, %91 : vector<8x8x16xf32>
    %94 = arith.addf %88, %93 : vector<8x8x16xf32>
    %95 = vector.extract_strided_slice %60 {offsets = [6, 0], sizes = [1, 16], strides = [1, 1]} : vector<9x16xf32> to vector<1x16xf32>
    %96 = vector.shape_cast %95 : vector<1x16xf32> to vector<1x1x16xf32>
    %c2_53 = arith.constant 2 : index
    %c0_54 = arith.constant 0 : index
    %c0_55 = arith.constant 0 : index
    %97 = vector.load %arg17[%c2_53, %c0_54, %c0_55] : memref<10x10x16xf32, #tpu.memory_space<vmem>>, vector<8x8x16xf32>
    %98 = vector.broadcast %96 : vector<1x1x16xf32> to vector<8x8x16xf32>
    %99 = arith.mulf %98, %97 : vector<8x8x16xf32>
    %100 = arith.addf %94, %99 : vector<8x8x16xf32>
    %101 = vector.extract_strided_slice %60 {offsets = [7, 0], sizes = [1, 16], strides = [1, 1]} : vector<9x16xf32> to vector<1x16xf32>
    %102 = vector.shape_cast %101 : vector<1x16xf32> to vector<1x1x16xf32>
    %c2_56 = arith.constant 2 : index
    %c1_57 = arith.constant 1 : index
    %c0_58 = arith.constant 0 : index
    %103 = vector.load %arg17[%c2_56, %c1_57, %c0_58] : memref<10x10x16xf32, #tpu.memory_space<vmem>>, vector<8x8x16xf32>
    %104 = vector.broadcast %102 : vector<1x1x16xf32> to vector<8x8x16xf32>
    %105 = arith.mulf %104, %103 : vector<8x8x16xf32>
    %106 = arith.addf %100, %105 : vector<8x8x16xf32>
    %107 = vector.extract_strided_slice %60 {offsets = [8, 0], sizes = [1, 16], strides = [1, 1]} : vector<9x16xf32> to vector<1x16xf32>
    %108 = vector.shape_cast %107 : vector<1x16xf32> to vector<1x1x16xf32>
    %c2_59 = arith.constant 2 : index
    %c2_60 = arith.constant 2 : index
    %c0_61 = arith.constant 0 : index
    %109 = vector.load %arg17[%c2_59, %c2_60, %c0_61] : memref<10x10x16xf32, #tpu.memory_space<vmem>>, vector<8x8x16xf32>
    %110 = vector.broadcast %108 : vector<1x1x16xf32> to vector<8x8x16xf32>
    %111 = arith.mulf %110, %109 : vector<8x8x16xf32>
    %112 = arith.addf %106, %111 : vector<8x8x16xf32>
    %113 = vector.shape_cast %112 : vector<8x8x16xf32> to vector<64x16xf32>
    %c0_62 = arith.constant 0 : index
    %c0_63 = arith.constant 0 : index
    %114 = vector.load %arg8[%c0_62, %c0_63] : memref<1x16xf32, #tpu.memory_space<vmem>>, vector<1x16xf32>
    %115 = vector.broadcast %114 : vector<1x16xf32> to vector<64x16xf32>
    %116 = arith.addf %113, %115 : vector<64x16xf32>
    %cst_64 = arith.constant 5.000000e-01 : f32
    %117 = vector.broadcast %cst_64 : f32 to vector<64x16xf32>
    %118 = arith.mulf %117, %116 : vector<64x16xf32>
    %cst_65 = arith.constant 0.707106769 : f32
    %119 = vector.broadcast %cst_65 : f32 to vector<64x16xf32>
    %120 = arith.mulf %116, %119 : vector<64x16xf32>
    %cst_66 = arith.constant 0.000000e+00 : f32
    %121 = vector.broadcast %cst_66 : f32 to vector<64x16xf32>
    %122 = arith.cmpf olt, %120, %121 : vector<64x16xf32>
    %cst_67 = arith.constant -1.000000e+00 : f32
    %cst_68 = arith.constant 1.000000e+00 : f32
    %123 = vector.broadcast %cst_67 : f32 to vector<64x16xf32>
    %124 = vector.broadcast %cst_68 : f32 to vector<64x16xf32>
    %125 = arith.select %122, %123, %124 : vector<64x16xi1>, vector<64x16xf32>
    %126 = math.absf %120 : vector<64x16xf32>
    %cst_69 = arith.constant 0.327591091 : f32
    %127 = vector.broadcast %cst_69 : f32 to vector<64x16xf32>
    %128 = arith.mulf %127, %126 : vector<64x16xf32>
    %cst_70 = arith.constant 1.000000e+00 : f32
    %129 = vector.broadcast %cst_70 : f32 to vector<64x16xf32>
    %130 = arith.addf %129, %128 : vector<64x16xf32>
    %131 = tpu.reciprocal %130 {approx = true} : vector<64x16xf32> -> vector<64x16xf32>
    %cst_71 = arith.constant 1.06140542 : f32
    %132 = vector.broadcast %cst_71 : f32 to vector<64x16xf32>
    %133 = arith.mulf %132, %131 : vector<64x16xf32>
    %cst_72 = arith.constant -1.45315206 : f32
    %134 = vector.broadcast %cst_72 : f32 to vector<64x16xf32>
    %135 = arith.addf %133, %134 : vector<64x16xf32>
    %136 = arith.mulf %135, %131 : vector<64x16xf32>
    %cst_73 = arith.constant 1.42141378 : f32
    %137 = vector.broadcast %cst_73 : f32 to vector<64x16xf32>
    %138 = arith.addf %136, %137 : vector<64x16xf32>
    %139 = arith.mulf %138, %131 : vector<64x16xf32>
    %cst_74 = arith.constant -0.284496725 : f32
    %140 = vector.broadcast %cst_74 : f32 to vector<64x16xf32>
    %141 = arith.addf %139, %140 : vector<64x16xf32>
    %142 = arith.mulf %141, %131 : vector<64x16xf32>
    %cst_75 = arith.constant 0.254829586 : f32
    %143 = vector.broadcast %cst_75 : f32 to vector<64x16xf32>
    %144 = arith.addf %142, %143 : vector<64x16xf32>
    %145 = arith.mulf %144, %131 : vector<64x16xf32>
    %cst_76 = arith.constant 0.000000e+00 : f32
    %146 = vector.broadcast %cst_76 : f32 to vector<64x16xf32>
    %147 = arith.subf %146, %126 : vector<64x16xf32>
    %148 = arith.mulf %147, %126 : vector<64x16xf32>
    %149 = math.exp %148 : vector<64x16xf32>
    %150 = arith.mulf %145, %149 : vector<64x16xf32>
    %cst_77 = arith.constant 1.000000e+00 : f32
    %151 = vector.broadcast %cst_77 : f32 to vector<64x16xf32>
    %152 = arith.subf %151, %150 : vector<64x16xf32>
    %153 = arith.mulf %125, %152 : vector<64x16xf32>
    %cst_78 = arith.constant 1.000000e+00 : f32
    %154 = vector.broadcast %cst_78 : f32 to vector<64x16xf32>
    %155 = arith.addf %154, %153 : vector<64x16xf32>
    %156 = arith.mulf %118, %155 : vector<64x16xf32>
    %cst_79 = arith.constant dense<0.000000e+00> : vector<16xf32>
    %157 = vector.multi_reduction <add>, %156, %cst_79 [0] : vector<64x16xf32> to vector<16xf32>
    %158 = vector.shape_cast %157 : vector<16xf32> to vector<1x16xf32>
    %cst_80 = arith.constant 6.400000e+01 : f32
    %159 = vector.broadcast %cst_80 : f32 to vector<1x16xf32>
    %160 = arith.divf %158, %159 : vector<1x16xf32>
    %c0_81 = arith.constant 0 : index
    %c0_82 = arith.constant 0 : index
    %161 = vector.load %arg9[%c0_81, %c0_82] : memref<16x4xf32, #tpu.memory_space<vmem>>, vector<16x4xf32>
    %cst_83 = arith.constant dense<0.000000e+00> : vector<1x4xf32>
    %162 = tpu.matmul %160, %161, %cst_83 {dimension_numbers = #tpu.dot_dimension_numbers<[1], [0], [0], [1], [0, 0, 1, 1], [], []>} : vector<1x16xf32>, vector<16x4xf32>, vector<1x4xf32> -> vector<1x4xf32>
    %c0_84 = arith.constant 0 : index
    %c0_85 = arith.constant 0 : index
    %163 = vector.load %arg10[%c0_84, %c0_85] : memref<1x4xf32, #tpu.memory_space<vmem>>, vector<1x4xf32>
    %164 = arith.addf %162, %163 : vector<1x4xf32>
    %cst_86 = arith.constant 5.000000e-01 : f32
    %165 = vector.broadcast %cst_86 : f32 to vector<1x4xf32>
    %166 = arith.mulf %165, %164 : vector<1x4xf32>
    %cst_87 = arith.constant 0.707106769 : f32
    %167 = vector.broadcast %cst_87 : f32 to vector<1x4xf32>
    %168 = arith.mulf %164, %167 : vector<1x4xf32>
    %cst_88 = arith.constant 0.000000e+00 : f32
    %169 = vector.broadcast %cst_88 : f32 to vector<1x4xf32>
    %170 = arith.cmpf olt, %168, %169 : vector<1x4xf32>
    %cst_89 = arith.constant -1.000000e+00 : f32
    %cst_90 = arith.constant 1.000000e+00 : f32
    %171 = vector.broadcast %cst_89 : f32 to vector<1x4xf32>
    %172 = vector.broadcast %cst_90 : f32 to vector<1x4xf32>
    %173 = arith.select %170, %171, %172 : vector<1x4xi1>, vector<1x4xf32>
    %174 = math.absf %168 : vector<1x4xf32>
    %cst_91 = arith.constant 0.327591091 : f32
    %175 = vector.broadcast %cst_91 : f32 to vector<1x4xf32>
    %176 = arith.mulf %175, %174 : vector<1x4xf32>
    %cst_92 = arith.constant 1.000000e+00 : f32
    %177 = vector.broadcast %cst_92 : f32 to vector<1x4xf32>
    %178 = arith.addf %177, %176 : vector<1x4xf32>
    %179 = tpu.reciprocal %178 {approx = true} : vector<1x4xf32> -> vector<1x4xf32>
    %cst_93 = arith.constant 1.06140542 : f32
    %180 = vector.broadcast %cst_93 : f32 to vector<1x4xf32>
    %181 = arith.mulf %180, %179 : vector<1x4xf32>
    %cst_94 = arith.constant -1.45315206 : f32
    %182 = vector.broadcast %cst_94 : f32 to vector<1x4xf32>
    %183 = arith.addf %181, %182 : vector<1x4xf32>
    %184 = arith.mulf %183, %179 : vector<1x4xf32>
    %cst_95 = arith.constant 1.42141378 : f32
    %185 = vector.broadcast %cst_95 : f32 to vector<1x4xf32>
    %186 = arith.addf %184, %185 : vector<1x4xf32>
    %187 = arith.mulf %186, %179 : vector<1x4xf32>
    %cst_96 = arith.constant -0.284496725 : f32
    %188 = vector.broadcast %cst_96 : f32 to vector<1x4xf32>
    %189 = arith.addf %187, %188 : vector<1x4xf32>
    %190 = arith.mulf %189, %179 : vector<1x4xf32>
    %cst_97 = arith.constant 0.254829586 : f32
    %191 = vector.broadcast %cst_97 : f32 to vector<1x4xf32>
    %192 = arith.addf %190, %191 : vector<1x4xf32>
    %193 = arith.mulf %192, %179 : vector<1x4xf32>
    %cst_98 = arith.constant 0.000000e+00 : f32
    %194 = vector.broadcast %cst_98 : f32 to vector<1x4xf32>
    %195 = arith.subf %194, %174 : vector<1x4xf32>
    %196 = arith.mulf %195, %174 : vector<1x4xf32>
    %197 = math.exp %196 : vector<1x4xf32>
    %198 = arith.mulf %193, %197 : vector<1x4xf32>
    %cst_99 = arith.constant 1.000000e+00 : f32
    %199 = vector.broadcast %cst_99 : f32 to vector<1x4xf32>
    %200 = arith.subf %199, %198 : vector<1x4xf32>
    %201 = arith.mulf %173, %200 : vector<1x4xf32>
    %cst_100 = arith.constant 1.000000e+00 : f32
    %202 = vector.broadcast %cst_100 : f32 to vector<1x4xf32>
    %203 = arith.addf %202, %201 : vector<1x4xf32>
    %204 = arith.mulf %166, %203 : vector<1x4xf32>
    %c0_101 = arith.constant 0 : index
    %c0_102 = arith.constant 0 : index
    %205 = vector.load %arg11[%c0_101, %c0_102] : memref<4x16xf32, #tpu.memory_space<vmem>>, vector<4x16xf32>
    %cst_103 = arith.constant dense<0.000000e+00> : vector<1x16xf32>
    %206 = tpu.matmul %204, %205, %cst_103 {dimension_numbers = #tpu.dot_dimension_numbers<[1], [0], [0], [1], [0, 0, 1, 1], [], []>} : vector<1x4xf32>, vector<4x16xf32>, vector<1x16xf32> -> vector<1x16xf32>
    %c0_104 = arith.constant 0 : index
    %c0_105 = arith.constant 0 : index
    %207 = vector.load %arg12[%c0_104, %c0_105] : memref<1x16xf32, #tpu.memory_space<vmem>>, vector<1x16xf32>
    %208 = arith.addf %206, %207 : vector<1x16xf32>
    %cst_106 = arith.constant 0.000000e+00 : f32
    %209 = vector.broadcast %cst_106 : f32 to vector<1x16xf32>
    %210 = arith.subf %209, %208 : vector<1x16xf32>
    %211 = math.exp %210 : vector<1x16xf32>
    %cst_107 = arith.constant 1.000000e+00 : f32
    %212 = vector.broadcast %cst_107 : f32 to vector<1x16xf32>
    %213 = arith.addf %212, %211 : vector<1x16xf32>
    %214 = tpu.reciprocal %213 {approx = true} : vector<1x16xf32> -> vector<1x16xf32>
    %215 = vector.broadcast %214 : vector<1x16xf32> to vector<64x16xf32>
    %216 = arith.mulf %156, %215 : vector<64x16xf32>
    %c0_108 = arith.constant 0 : index
    %c0_109 = arith.constant 0 : index
    %c0_110 = arith.constant 0 : index
    %c0_111 = arith.constant 0 : index
    %217 = vector.load %arg2[%c0_108, %c0_109, %c0_110, %c0_111] : memref<1x9x9x4xf32, #tpu.memory_space<vmem>>, vector<1x8x8x4xf32>
    %218 = vector.shape_cast %217 : vector<1x8x8x4xf32> to vector<8x8x4xf32>
    %c0_112 = arith.constant 0 : index
    %c0_113 = arith.constant 0 : index
    %c0_114 = arith.constant 0 : index
    %c0_115 = arith.constant 0 : index
    %219 = vector.load %arg3[%c0_112, %c0_113, %c0_114, %c0_115] : memref<1x9x8x4xf32, #tpu.memory_space<vmem>>, vector<1x8x8x4xf32>
    %220 = vector.shape_cast %219 : vector<1x8x8x4xf32> to vector<8x8x4xf32>
    %c0_116 = arith.constant 0 : index
    %c0_117 = arith.constant 0 : index
    %c1_118 = arith.constant 1 : index
    %c0_119 = arith.constant 0 : index
    %221 = vector.load %arg2[%c0_116, %c0_117, %c1_118, %c0_119] : memref<1x9x9x4xf32, #tpu.memory_space<vmem>>, vector<1x8x8x4xf32>
    %222 = vector.shape_cast %221 : vector<1x8x8x4xf32> to vector<8x8x4xf32>
    %c0_120 = arith.constant 0 : index
    %c0_121 = arith.constant 0 : index
    %c0_122 = arith.constant 0 : index
    %c0_123 = arith.constant 0 : index
    %223 = vector.load %arg4[%c0_120, %c0_121, %c0_122, %c0_123] : memref<1x8x9x4xf32, #tpu.memory_space<vmem>>, vector<1x8x8x4xf32>
    %224 = vector.shape_cast %223 : vector<1x8x8x4xf32> to vector<8x8x4xf32>
    %c0_124 = arith.constant 0 : index
    %c0_125 = arith.constant 0 : index
    %c1_126 = arith.constant 1 : index
    %c0_127 = arith.constant 0 : index
    %225 = vector.load %arg4[%c0_124, %c0_125, %c1_126, %c0_127] : memref<1x8x9x4xf32, #tpu.memory_space<vmem>>, vector<1x8x8x4xf32>
    %226 = vector.shape_cast %225 : vector<1x8x8x4xf32> to vector<8x8x4xf32>
    %c0_128 = arith.constant 0 : index
    %c1_129 = arith.constant 1 : index
    %c0_130 = arith.constant 0 : index
    %c0_131 = arith.constant 0 : index
    %227 = vector.load %arg2[%c0_128, %c1_129, %c0_130, %c0_131] : memref<1x9x9x4xf32, #tpu.memory_space<vmem>>, vector<1x8x8x4xf32>
    %228 = vector.shape_cast %227 : vector<1x8x8x4xf32> to vector<8x8x4xf32>
    %c0_132 = arith.constant 0 : index
    %c1_133 = arith.constant 1 : index
    %c0_134 = arith.constant 0 : index
    %c0_135 = arith.constant 0 : index
    %229 = vector.load %arg3[%c0_132, %c1_133, %c0_134, %c0_135] : memref<1x9x8x4xf32, #tpu.memory_space<vmem>>, vector<1x8x8x4xf32>
    %230 = vector.shape_cast %229 : vector<1x8x8x4xf32> to vector<8x8x4xf32>
    %c0_136 = arith.constant 0 : index
    %c1_137 = arith.constant 1 : index
    %c1_138 = arith.constant 1 : index
    %c0_139 = arith.constant 0 : index
    %231 = vector.load %arg2[%c0_136, %c1_137, %c1_138, %c0_139] : memref<1x9x9x4xf32, #tpu.memory_space<vmem>>, vector<1x8x8x4xf32>
    %232 = vector.shape_cast %231 : vector<1x8x8x4xf32> to vector<8x8x4xf32>
    %233 = arith.maximumf %218, %220 : vector<8x8x4xf32>
    %234 = arith.maximumf %222, %224 : vector<8x8x4xf32>
    %235 = arith.maximumf %1, %226 : vector<8x8x4xf32>
    %236 = arith.maximumf %228, %230 : vector<8x8x4xf32>
    %237 = arith.maximumf %233, %234 : vector<8x8x4xf32>
    %238 = arith.maximumf %235, %236 : vector<8x8x4xf32>
    %239 = arith.maximumf %237, %238 : vector<8x8x4xf32>
    %240 = arith.maximumf %239, %232 : vector<8x8x4xf32>
    %241 = vector.shape_cast %240 : vector<8x8x4xf32> to vector<64x4xf32>
    %c0_140 = arith.constant 0 : index
    %c0_141 = arith.constant 0 : index
    %242 = vector.load %arg13[%c0_140, %c0_141] : memref<16x8xf32, #tpu.memory_space<vmem>>, vector<16x8xf32>
    %cst_142 = arith.constant dense<0.000000e+00> : vector<64x8xf32>
    %243 = tpu.matmul %216, %242, %cst_142 {dimension_numbers = #tpu.dot_dimension_numbers<[1], [0], [0], [1], [0, 0, 1, 1], [], []>} : vector<64x16xf32>, vector<16x8xf32>, vector<64x8xf32> -> vector<64x8xf32>
    %c0_143 = arith.constant 0 : index
    %c0_144 = arith.constant 0 : index
    %244 = vector.load %arg14[%c0_143, %c0_144] : memref<4x8xf32, #tpu.memory_space<vmem>>, vector<4x8xf32>
    %cst_145 = arith.constant dense<0.000000e+00> : vector<64x8xf32>
    %245 = tpu.matmul %241, %244, %cst_145 {dimension_numbers = #tpu.dot_dimension_numbers<[1], [0], [0], [1], [0, 0, 1, 1], [], []>} : vector<64x4xf32>, vector<4x8xf32>, vector<64x8xf32> -> vector<64x8xf32>
    %246 = arith.addf %243, %245 : vector<64x8xf32>
    %c0_146 = arith.constant 0 : index
    %c0_147 = arith.constant 0 : index
    %247 = vector.load %arg15[%c0_146, %c0_147] : memref<1x8xf32, #tpu.memory_space<vmem>>, vector<1x8xf32>
    %248 = vector.broadcast %247 : vector<1x8xf32> to vector<64x8xf32>
    %249 = arith.addf %246, %248 : vector<64x8xf32>
    %c0_148 = arith.constant 0 : index
    %c0_149 = arith.constant 0 : index
    %c0_150 = arith.constant 0 : index
    %250 = vector.load %arg16[%c0_148, %c0_149, %c0_150] : memref<1x64x8xf32, #tpu.memory_space<vmem>>, vector<1x64x8xf32>
    %251 = vector.shape_cast %250 : vector<1x64x8xf32> to vector<64x8xf32>
    %252 = vector.shape_cast %249 : vector<64x8xf32> to vector<1x64x8xf32>
    tpu.vector_store %arg16[%c0_148, %c0_149, %c0_150], %252 {strides = array<i32>} : memref<1x64x8xf32, #tpu.memory_space<vmem>>, vector<1x64x8xf32>,
    return
  }
  func.func @transform_0(%arg0: i32) -> (i32, i32, i32, i32) {
    %c0_i32 = arith.constant 0 : i32
    %c0_i32_0 = arith.constant 0 : i32
    %c0_i32_1 = arith.constant 0 : i32
    %c0_i32_2 = arith.constant 0 : i32
    return %arg0, %c0_i32, %c0_i32_0, %c0_i32_1 : i32, i32, i32, i32
  }
  func.func @transform_1(%arg0: i32) -> (i32, i32, i32, i32) {
    %c0_i32 = arith.constant 0 : i32
    %c0_i32_0 = arith.constant 0 : i32
    %c0_i32_1 = arith.constant 0 : i32
    %c0_i32_2 = arith.constant 0 : i32
    return %arg0, %c0_i32, %c0_i32_0, %c0_i32_1 : i32, i32, i32, i32
  }
  func.func @transform_2(%arg0: i32) -> (i32, i32, i32, i32) {
    %c0_i32 = arith.constant 0 : i32
    %c0_i32_0 = arith.constant 0 : i32
    %c0_i32_1 = arith.constant 0 : i32
    %c0_i32_2 = arith.constant 0 : i32
    return %arg0, %c0_i32, %c0_i32_0, %c0_i32_1 : i32, i32, i32, i32
  }
  func.func @transform_3(%arg0: i32) -> (i32, i32, i32, i32) {
    %c0_i32 = arith.constant 0 : i32
    %c0_i32_0 = arith.constant 0 : i32
    %c0_i32_1 = arith.constant 0 : i32
    %c0_i32_2 = arith.constant 0 : i32
    return %arg0, %c0_i32, %c0_i32_0, %c0_i32_1 : i32, i32, i32, i32
  }
  func.func @transform_4(%arg0: i32) -> (i32, i32) {
    %c0_i32 = arith.constant 0 : i32
    %c0_i32_0 = arith.constant 0 : i32
    %c0_i32_1 = arith.constant 0 : i32
    return %c0_i32, %c0_i32_0 : i32, i32
  }
  func.func @transform_5(%arg0: i32) -> (i32, i32) {
    %c0_i32 = arith.constant 0 : i32
    %c0_i32_0 = arith.constant 0 : i32
    %c0_i32_1 = arith.constant 0 : i32
    return %c0_i32, %c0_i32_0 : i32, i32
  }
  func.func @transform_6(%arg0: i32) -> (i32, i32) {
    %c0_i32 = arith.constant 0 : i32
    %c0_i32_0 = arith.constant 0 : i32
    %c0_i32_1 = arith.constant 0 : i32
    return %c0_i32, %c0_i32_0 : i32, i32
  }
  func.func @transform_7(%arg0: i32) -> (i32, i32) {
    %c0_i32 = arith.constant 0 : i32
    %c0_i32_0 = arith.constant 0 : i32
    %c0_i32_1 = arith.constant 0 : i32
    return %c0_i32, %c0_i32_0 : i32, i32
  }
  func.func @transform_8(%arg0: i32) -> (i32, i32) {
    %c0_i32 = arith.constant 0 : i32
    %c0_i32_0 = arith.constant 0 : i32
    %c0_i32_1 = arith.constant 0 : i32
    return %c0_i32, %c0_i32_0 : i32, i32
  }
  func.func @transform_9(%arg0: i32) -> (i32, i32) {
    %c0_i32 = arith.constant 0 : i32
    %c0_i32_0 = arith.constant 0 : i32
    %c0_i32_1 = arith.constant 0 : i32
    return %c0_i32, %c0_i32_0 : i32, i32
  }
  func.func @transform_10(%arg0: i32) -> (i32, i32) {
    %c0_i32 = arith.constant 0 : i32
    %c0_i32_0 = arith.constant 0 : i32
    %c0_i32_1 = arith.constant 0 : i32
    return %c0_i32, %c0_i32_0 : i32, i32
  }
  func.func @transform_11(%arg0: i32) -> (i32, i32) {
    %c0_i32 = arith.constant 0 : i32
    %c0_i32_0 = arith.constant 0 : i32
    %c0_i32_1 = arith.constant 0 : i32
    return %c0_i32, %c0_i32_0 : i32, i32
  }
  func.func @transform_12(%arg0: i32) -> (i32, i32) {
    %c0_i32 = arith.constant 0 : i32
    %c0_i32_0 = arith.constant 0 : i32
    %c0_i32_1 = arith.constant 0 : i32
    return %c0_i32, %c0_i32_0 : i32, i32
  }
  func.func @transform_13(%arg0: i32) -> (i32, i32) {
    %c0_i32 = arith.constant 0 : i32
    %c0_i32_0 = arith.constant 0 : i32
    %c0_i32_1 = arith.constant 0 : i32
    return %c0_i32, %c0_i32_0 : i32, i32
  }
  func.func @transform_14(%arg0: i32) -> (i32, i32) {
    %c0_i32 = arith.constant 0 : i32
    %c0_i32_0 = arith.constant 0 : i32
    %c0_i32_1 = arith.constant 0 : i32
    return %c0_i32, %c0_i32_0 : i32, i32
  }
  func.func @transform_15(%arg0: i32) -> (i32, i32, i32) {
    %c0_i32 = arith.constant 0 : i32
    %c0_i32_0 = arith.constant 0 : i32
    %c0_i32_1 = arith.constant 0 : i32
    return %arg0, %c0_i32, %c0_i32_0 : i32, i32, i32
  }
}

</mosaic_0001>

<llo_original>
// kernel: mbconv_forward.1
$region0: #{mbconv_forward.1}
  #allocation0 [shape = 'u32[]', space=smem, size = 0x4, offset = 0x4, fixed_abs, tag = 'smem constant byte address 0x4 - core index']
  #allocation1 [shape = 'u32[144,128]{1,0:T(1,128)}', space=vmem, size = 0x12000, scoped, tag = 'internal scratch']
  #allocation2 [shape = 'f32[10,10,16]{2,1,0:T(8,128)}', space=vmem, size = 0x14000, scoped, tag = 'scratch operand']
  %s0 = inlined_call_operand.vmem [shape: f32[2,8,8,4], index: 0, kind: input, shape index: {}]
  %s1 = inlined_call_operand.vmem [shape: f32[2,9,9,4], index: 1, kind: input, shape index: {}]
  %s2 = inlined_call_operand.vmem [shape: f32[2,9,8,4], index: 2, kind: input, shape index: {}]
  %s3 = inlined_call_operand.vmem [shape: f32[2,8,9,4], index: 3, kind: input, shape index: {}]
  %s4 = inlined_call_operand.vmem [shape: f32[4,16], index: 4, kind: input, shape index: {}]
  %s5 = inlined_call_operand.vmem [shape: f32[1,16], index: 5, kind: input, shape index: {}]
  %s6 = inlined_call_operand.vmem [shape: f32[9,16], index: 6, kind: input, shape index: {}]
  %s7 = inlined_call_operand.vmem [shape: f32[1,16], index: 7, kind: input, shape index: {}]
  %s8 = inlined_call_operand.vmem [shape: f32[16,4], index: 8, kind: input, shape index: {}]
  %s9 = inlined_call_operand.vmem [shape: f32[1,4], index: 9, kind: input, shape index: {}]
  %s10 = inlined_call_operand.vmem [shape: f32[4,16], index: 10, kind: input, shape index: {}]
  %s11 = inlined_call_operand.vmem [shape: f32[1,16], index: 11, kind: input, shape index: {}]
  %s12 = inlined_call_operand.vmem [shape: f32[16,8], index: 12, kind: input, shape index: {}]
  %s13 = inlined_call_operand.vmem [shape: f32[4,8], index: 13, kind: input, shape index: {}]
  %s14 = inlined_call_operand.vmem [shape: f32[1,8], index: 14, kind: input, shape index: {}]
  %s15 = inlined_call_operand.vmem [shape: f32[2,64,8], index: 15, kind: output, shape index: {}]
  %s16 = sld [smem:[#allocation0]]
  $region93: #{mbconv_forward.1} parent=0
    _
  %s18 = ssub.s32 1, %s16
  %s19 = scalar_select 0, %s18, %s16
  loop: start=0, step=1, limit=4
  $region2: #{mbconv_forward.1} parent=0 // loop_pre_header
    _
  $region3: #{mbconv_forward.1} parent=0 // loop_header
    %s21 = sphi 0, %s25
    %p22 = scmp.ge.s32.totalorder %s21, 4
    %s31 = sphi 0, %s33
    %s34 = sphi 0, %s31
    %s35 = sphi 0, %s34
    %s51 = sphi 0, %s35
    %s57 = sphi 0, %s59
    %s60 = sphi 0, %s57
    %s61 = sphi 0, %s60
    %s77 = sphi 0, %s61
    %s83 = sphi 0, %s85
    %s86 = sphi 0, %s83
    %s87 = sphi 0, %s86
    %s103 = sphi 0, %s87
    %s109 = sphi 0, %s111
    %s112 = sphi 0, %s109
    %s113 = sphi 0, %s112
    %s129 = sphi 0, %s113
    %s133 = sphi 0, %s133
    %s135 = sphi 0, %s133
    %s136 = sphi 0, %s135
    %s150 = sphi 0, %s136
    %s154 = sphi 0, %s154
    %s156 = sphi 0, %s154
    %s157 = sphi 0, %s156
    %s171 = sphi 0, %s157
    %s175 = sphi 0, %s175
    %s177 = sphi 0, %s175
    %s178 = sphi 0, %s177
    %s192 = sphi 0, %s178
    %s196 = sphi 0, %s196
    %s198 = sphi 0, %s196
    %s199 = sphi 0, %s198
    %s213 = sphi 0, %s199
    %s217 = sphi 0, %s217
    %s219 = sphi 0, %s217
    %s220 = sphi 0, %s219
    %s234 = sphi 0, %s220
    %s238 = sphi 0, %s238
    %s240 = sphi 0, %s238
    %s241 = sphi 0, %s240
    %s255 = sphi 0, %s241
    %s259 = sphi 0, %s259
    %s261 = sphi 0, %s259
    %s262 = sphi 0, %s261
    %s276 = sphi 0, %s262
    %s280 = sphi 0, %s280
    %s282 = sphi 0, %s280
    %s283 = sphi 0, %s282
    %s297 = sphi 0, %s283
    %s301 = sphi 0, %s301
    %s303 = sphi 0, %s301
    %s304 = sphi 0, %s303
    %s318 = sphi 0, %s304
    %s322 = sphi 0, %s322
    %s324 = sphi 0, %s322
    %s325 = sphi 0, %s324
    %s339 = sphi 0, %s325
    %s343 = sphi 0, %s343
    %s345 = sphi 0, %s343
    %s346 = sphi 0, %s345
    %s360 = sphi 0, %s346
    %s366 = sphi 0, %s368
    %s369 = sphi 0, %s366
    %s370 = sphi 0, %s369
    %s386 = sphi 0, %s370
  $region4: #{mbconv_forward.1} parent=0 // loop_header_branch
    %24 = sbr.rel (%p22) target = $region8
  $region5: #{mbconv_forward.1} parent=0 // loop_body
    %s26 = ssub.s32 %s21, 1
    %s27 = ssub.s32 %s21, 2
    %s28 = sadd.s32 %s21, 1
    %s29 = ssub.s32 %s21, %s28
    %p30 = scmp.eq.s32.totalorder %s29, 0
    %s32 = sadd.s32 %s31, 1
    %s33 = scalar_select %p30, %s31, %s32
    %p36 = pneg %p30
    %p37 = scmp.eq.s32.totalorder %s21, 1
    %p38 = por %p36, %p37
    %p39 = scmp.ne.s32.totalorder %s31, %s34
    %p40 = scmp.eq.s32.totalorder %s21, 0
    %p41 = por %p39, %p40
    %p42 = scmp.ne.s32.totalorder %s31, %s34
    %p43 = scmp.eq.s32.totalorder %s26, 1
    %p44 = por %p42, %p43
    %p45 = scmp.ne.s32.totalorder %s34, %s35
    %p46 = scmp.eq.s32.totalorder %s26, 0
    %p47 = por %p45, %p46
    %p48 = scmp.ne.s32.totalorder %s34, %s35
    %p49 = scmp.eq.s32.totalorder %s27, 1
    %p50 = por %p48, %p49
    %p52 = scmp.ne.s32.totalorder %s35, %s51
    %p53 = scmp.eq.s32.totalorder %s27, 0
    %p54 = por %p52, %p53
    %s55 = ssub.s32 %s21, %s28
    %p56 = scmp.eq.s32.totalorder %s55, 0
    %s58 = sadd.s32 %s57, 1
    %s59 = scalar_select %p56, %s57, %s58
    %p62 = pneg %p56
    %p63 = scmp.eq.s32.totalorder %s21, 1
    %p64 = por %p62, %p63
    %p65 = scmp.ne.s32.totalorder %s57, %s60
    %p66 = scmp.eq.s32.totalorder %s21, 0
    %p67 = por %p65, %p66
    %p68 = scmp.ne.s32.totalorder %s57, %s60
    %p69 = scmp.eq.s32.totalorder %s26, 1
    %p70 = por %p68, %p69
    %p71 = scmp.ne.s32.totalorder %s60, %s61
    %p72 = scmp.eq.s32.totalorder %s26, 0
    %p73 = por %p71, %p72
    %p74 = scmp.ne.s32.totalorder %s60, %s61
    %p75 = scmp.eq.s32.totalorder %s27, 1
    %p76 = por %p74, %p75
    %p78 = scmp.ne.s32.totalorder %s61, %s77
    %p79 = scmp.eq.s32.totalorder %s27, 0
    %p80 = por %p78, %p79
    %s81 = ssub.s32 %s21, %s28
    %p82 = scmp.eq.s32.totalorder %s81, 0
    %s84 = sadd.s32 %s83, 1
    %s85 = scalar_select %p82, %s83, %s84
    %p88 = pneg %p82
    %p89 = scmp.eq.s32.totalorder %s21, 1
    %p90 = por %p88, %p89
    %p91 = scmp.ne.s32.totalorder %s83, %s86
    %p92 = scmp.eq.s32.totalorder %s21, 0
    %p93 = por %p91, %p92
    %p94 = scmp.ne.s32.totalorder %s83, %s86
    %p95 = scmp.eq.s32.totalorder %s26, 1
    %p96 = por %p94, %p95
    %p97 = scmp.ne.s32.totalorder %s86, %s87
    %p98 = scmp.eq.s32.totalorder %s26, 0
    %p99 = por %p97, %p98
    %p100 = scmp.ne.s32.totalorder %s86, %s87
    %p101 = scmp.eq.s32.totalorder %s27, 1
    %p102 = por %p100, %p101
    %p104 = scmp.ne.s32.totalorder %s87, %s103
    %p105 = scmp.eq.s32.totalorder %s27, 0
    %p106 = por %p104, %p105
    %s107 = ssub.s32 %s21, %s28
    %p108 = scmp.eq.s32.totalorder %s107, 0
    %s110 = sadd.s32 %s109, 1
    %s111 = scalar_select %p108, %s109, %s110
    %p114 = pneg %p108
    %p115 = scmp.eq.s32.totalorder %s21, 1
    %p116 = por %p114, %p115
    %p117 = scmp.ne.s32.totalorder %s109, %s112
    %p118 = scmp.eq.s32.totalorder %s21, 0
    %p119 = por %p117, %p118
    %p120 = scmp.ne.s32.totalorder %s109, %s112
    %p121 = scmp.eq.s32.totalorder %s26, 1
    %p122 = por %p120, %p121
    %p123 = scmp.ne.s32.totalorder %s112, %s113
    %p124 = scmp.eq.s32.totalorder %s26, 0
    %p125 = por %p123, %p124
    %p126 = scmp.ne.s32.totalorder %s112, %s113
    %p127 = scmp.eq.s32.totalorder %s27, 1
    %p128 = por %p126, %p127
    %p130 = scmp.ne.s32.totalorder %s113, %s129
    %p131 = scmp.eq.s32.totalorder %s27, 0
    %p132 = por %p130, %p131
    %s134 = sadd.s32 %s133, 1
    %p137 = scmp.eq.s32.totalorder %s21, 1
    %p138 = scmp.ne.s32.totalorder %s133, %s135
    %p139 = scmp.eq.s32.totalorder %s21, 0
    %p140 = por %p138, %p139
    %p141 = scmp.ne.s32.totalorder %s133, %s135
    %p142 = scmp.eq.s32.totalorder %s26, 1
    %p143 = por %p141, %p142
    %p144 = scmp.ne.s32.totalorder %s135, %s136
    %p145 = scmp.eq.s32.totalorder %s26, 0
    %p146 = por %p144, %p145
    %p147 = scmp.ne.s32.totalorder %s135, %s136
    %p148 = scmp.eq.s32.totalorder %s27, 1
    %p149 = por %p147, %p148
    %p151 = scmp.ne.s32.totalorder %s136, %s150
    %p152 = scmp.eq.s32.totalorder %s27, 0
    %p153 = por %p151, %p152
    %s155 = sadd.s32 %s154, 1
    %p158 = scmp.eq.s32.totalorder %s21, 1
    %p159 = scmp.ne.s32.totalorder %s154, %s156
    %p160 = scmp.eq.s32.totalorder %s21, 0
    %p161 = por %p159, %p160
    %p162 = scmp.ne.s32.totalorder %s154, %s156
    %p163 = scmp.eq.s32.totalorder %s26, 1
    %p164 = por %p162, %p163
    %p165 = scmp.ne.s32.totalorder %s156, %s157
    %p166 = scmp.eq.s32.totalorder %s26, 0
    %p167 = por %p165, %p166
    %p168 = scmp.ne.s32.totalorder %s156, %s157
    %p169 = scmp.eq.s32.totalorder %s27, 1
    %p170 = por %p168, %p169
    %p172 = scmp.ne.s32.totalorder %s157, %s171
    %p173 = scmp.eq.s32.totalorder %s27, 0
    %p174 = por %p172, %p173
    %s176 = sadd.s32 %s175, 1
    %p179 = scmp.eq.s32.totalorder %s21, 1
    %p180 = scmp.ne.s32.totalorder %s175, %s177
    %p181 = scmp.eq.s32.totalorder %s21, 0
    %p182 = por %p180, %p181
    %p183 = scmp.ne.s32.totalorder %s175, %s177
    %p184 = scmp.eq.s32.totalorder %s26, 1
    %p185 = por %p183, %p184
    %p186 = scmp.ne.s32.totalorder %s177, %s178
    %p187 = scmp.eq.s32.totalorder %s26, 0
    %p188 = por %p186, %p187
    %p189 = scmp.ne.s32.totalorder %s177, %s178
    %p190 = scmp.eq.s32.totalorder %s27, 1
    %p191 = por %p189, %p190
    %p193 = scmp.ne.s32.totalorder %s178, %s192
    %p194 = scmp.eq.s32.totalorder %s27, 0
    %p195 = por %p193, %p194
    %s197 = sadd.s32 %s196, 1
    %p200 = scmp.eq.s32.totalorder %s21, 1
    %p201 = scmp.ne.s32.totalorder %s196, %s198
    %p202 = scmp.eq.s32.totalorder %s21, 0
    %p203 = por %p201, %p202
    %p204 = scmp.ne.s32.totalorder %s196, %s198
    %p205 = scmp.eq.s32.totalorder %s26, 1
    %p206 = por %p204, %p205
    %p207 = scmp.ne.s32.totalorder %s198, %s199
    %p208 = scmp.eq.s32.totalorder %s26, 0
    %p209 = por %p207, %p208
    %p210 = scmp.ne.s32.totalorder %s198, %s199
    %p211 = scmp.eq.s32.totalorder %s27, 1
    %p212 = por %p210, %p211
    %p214 = scmp.ne.s32.totalorder %s199, %s213
    %p215 = scmp.eq.s32.totalorder %s27, 0
    %p216 = por %p214, %p215
    %s218 = sadd.s32 %s217, 1
    %p221 = scmp.eq.s32.totalorder %s21, 1
    %p222 = scmp.ne.s32.totalorder %s217, %s219
    %p223 = scmp.eq.s32.totalorder %s21, 0
    %p224 = por %p222, %p223
    %p225 = scmp.ne.s32.totalorder %s217, %s219
    %p226 = scmp.eq.s32.totalorder %s26, 1
    %p227 = por %p225, %p226
    %p228 = scmp.ne.s32.totalorder %s219, %s220
    %p229 = scmp.eq.s32.totalorder %s26, 0
    %p230 = por %p228, %p229
    %p231 = scmp.ne.s32.totalorder %s219, %s220
    %p232 = scmp.eq.s32.totalorder %s27, 1
    %p233 = por %p231, %p232
    %p235 = scmp.ne.s32.totalorder %s220, %s234
    %p236 = scmp.eq.s32.totalorder %s27, 0
    %p237 = por %p235, %p236
    %s239 = sadd.s32 %s238, 1
    %p242 = scmp.eq.s32.totalorder %s21, 1
    %p243 = scmp.ne.s32.totalorder %s238, %s240
    %p244 = scmp.eq.s32.totalorder %s21, 0
    %p245 = por %p243, %p244
    %p246 = scmp.ne.s32.totalorder %s238, %s240
    %p247 = scmp.eq.s32.totalorder %s26, 1
    %p248 = por %p246, %p247
    %p249 = scmp.ne.s32.totalorder %s240, %s241
    %p250 = scmp.eq.s32.totalorder %s26, 0
    %p251 = por %p249, %p250
    %p252 = scmp.ne.s32.totalorder %s240, %s241
    %p253 = scmp.eq.s32.totalorder %s27, 1
    %p254 = por %p252, %p253
    %p256 = scmp.ne.s32.totalorder %s241, %s255
    %p257 = scmp.eq.s32.totalorder %s27, 0
    %p258 = por %p256, %p257
    %s260 = sadd.s32 %s259, 1
    %p263 = scmp.eq.s32.totalorder %s21, 1
    %p264 = scmp.ne.s32.totalorder %s259, %s261
    %p265 = scmp.eq.s32.totalorder %s21, 0
    %p266 = por %p264, %p265
    %p267 = scmp.ne.s32.totalorder %s259, %s261
    %p268 = scmp.eq.s32.totalorder %s26, 1
    %p269 = por %p267, %p268
    %p270 = scmp.ne.s32.totalorder %s261, %s262
    %p271 = scmp.eq.s32.totalorder %s26, 0
    %p272 = por %p270, %p271
    %p273 = scmp.ne.s32.totalorder %s261, %s262
    %p274 = scmp.eq.s32.totalorder %s27, 1
    %p275 = por %p273, %p274
    %p277 = scmp.ne.s32.totalorder %s262, %s276
    %p278 = scmp.eq.s32.totalorder %s27, 0
    %p279 = por %p277, %p278
    %s281 = sadd.s32 %s280, 1
    %p284 = scmp.eq.s32.totalorder %s21, 1
    %p285 = scmp.ne.s32.totalorder %s280, %s282
    %p286 = scmp.eq.s32.totalorder %s21, 0
    %p287 = por %p285, %p286
    %p288 = scmp.ne.s32.totalorder %s280, %s282
    %p289 = scmp.eq.s32.totalorder %s26, 1
    %p290 = por %p288, %p289
    %p291 = scmp.ne.s32.totalorder %s282, %s283
    %p292 = scmp.eq.s32.totalorder %s26, 0
    %p293 = por %p291, %p292
    %p294 = scmp.ne.s32.totalorder %s282, %s283
    %p295 = scmp.eq.s32.totalorder %s27, 1
    %p296 = por %p294, %p295
    %p298 = scmp.ne.s32.totalorder %s283, %s297
    %p299 = scmp.eq.s32.totalorder %s27, 0
    %p300 = por %p298, %p299
    %s302 = sadd.s32 %s301, 1
    %p305 = scmp.eq.s32.totalorder %s21, 1
    %p306 = scmp.ne.s32.totalorder %s301, %s303
    %p307 = scmp.eq.s32.totalorder %s21, 0
    %p308 = por %p306, %p307
    %p309 = scmp.ne.s32.totalorder %s301, %s303
    %p310 = scmp.eq.s32.totalorder %s26, 1
    %p311 = por %p309, %p310
    %p312 = scmp.ne.s32.totalorder %s303, %s304
    %p313 = scmp.eq.s32.totalorder %s26, 0
    %p314 = por %p312, %p313
    %p315 = scmp.ne.s32.totalorder %s303, %s304
    %p316 = scmp.eq.s32.totalorder %s27, 1
    %p317 = por %p315, %p316
    %p319 = scmp.ne.s32.totalorder %s304, %s318
    %p320 = scmp.eq.s32.totalorder %s27, 0
    %p321 = por %p319, %p320
    %s323 = sadd.s32 %s322, 1
    %p326 = scmp.eq.s32.totalorder %s21, 1
    %p327 = scmp.ne.s32.totalorder %s322, %s324
    %p328 = scmp.eq.s32.totalorder %s21, 0
    %p329 = por %p327, %p328
    %p330 = scmp.ne.s32.totalorder %s322, %s324
    %p331 = scmp.eq.s32.totalorder %s26, 1
    %p332 = por %p330, %p331
    %p333 = scmp.ne.s32.totalorder %s324, %s325
    %p334 = scmp.eq.s32.totalorder %s26, 0
    %p335 = por %p333, %p334
    %p336 = scmp.ne.s32.totalorder %s324, %s325
    %p337 = scmp.eq.s32.totalorder %s27, 1
    %p338 = por %p336, %p337
    %p340 = scmp.ne.s32.totalorder %s325, %s339
    %p341 = scmp.eq.s32.totalorder %s27, 0
    %p342 = por %p340, %p341
    %s344 = sadd.s32 %s343, 1
    %p347 = scmp.eq.s32.totalorder %s21, 1
    %p348 = scmp.ne.s32.totalorder %s343, %s345
    %p349 = scmp.eq.s32.totalorder %s21, 0
    %p350 = por %p348, %p349
    %p351 = scmp.ne.s32.totalorder %s343, %s345
    %p352 = scmp.eq.s32.totalorder %s26, 1
    %p353 = por %p351, %p352
    %p354 = scmp.ne.s32.totalorder %s345, %s346
    %p355 = scmp.eq.s32.totalorder %s26, 0
    %p356 = por %p354, %p355
    %p357 = scmp.ne.s32.totalorder %s345, %s346
    %p358 = scmp.eq.s32.totalorder %s27, 1
    %p359 = por %p357, %p358
    %p361 = scmp.ne.s32.totalorder %s346, %s360
    %p362 = scmp.eq.s32.totalorder %s27, 0
    %p363 = por %p361, %p362
    %s364 = ssub.s32 %s21, %s28
    %p365 = scmp.eq.s32.totalorder %s364, 0
    %s367 = sadd.s32 %s366, 1
    %s368 = scalar_select %p365, %s366, %s367
    %p371 = pneg %p365
    %p372 = scmp.eq.s32.totalorder %s21, 1
    %p373 = por %p371, %p372
    %p374 = scmp.ne.s32.totalorder %s366, %s369
    %p375 = scmp.eq.s32.totalorder %s21, 0
    %p376 = por %p374, %p375
    %p377 = scmp.ne.s32.totalorder %s366, %s369
    %p378 = scmp.eq.s32.totalorder %s26, 1
    %p379 = por %p377, %p378
    %p380 = scmp.ne.s32.totalorder %s369, %s370
    %p381 = scmp.eq.s32.totalorder %s26, 0
    %p382 = por %p380, %p381
    %p383 = scmp.ne.s32.totalorder %s369, %s370
    %p384 = scmp.eq.s32.totalorder %s27, 1
    %p385 = por %p383, %p384
    %p387 = scmp.ne.s32.totalorder %s370, %s386
    %p388 = scmp.eq.s32.totalorder %s27, 0
    %p389 = por %p387, %p388
    %p390 = scmp.le.s32.totalorder 1, %s21
    %p391 = scmp.lt.s32.totalorder %s21, 3
    %p392 = pnand %p390, %p391
    %p393 = pneg %p392
    // Predicated region
    $region9: #{mbconv_forward.1} parent=5 // pred_check
      _
    $region10: #{mbconv_forward.1} parent=5 // pred_check_branch
      %395 = sbr.rel (%p392) target = $region12
    $region11: #{mbconv_forward.1} parent=5 // pred_region
      %s396 = ssub.s32 %s21, 1
      // Predicated region
      $region13: #{mbconv_forward.1} parent=11 // pred_check
        %p397 = pneg %p146
      $region14: #{mbconv_forward.1} parent=11 // pred_check_branch
        %399 = sbr.rel (%p397) target = $region16
      $region15: #{mbconv_forward.1} parent=11 // pred_region
        _
      $region16: #{mbconv_forward.1} parent=11 // pred_fallthru
        _
      // Predicated region
      $region17: #{mbconv_forward.1} parent=11 // pred_check
        %p400 = pneg %p167
      $region18: #{mbconv_forward.1} parent=11 // pred_check_branch
        %402 = sbr.rel (%p400) target = $region20
      $region19: #{mbconv_forward.1} parent=11 // pred_region
        _
      $region20: #{mbconv_forward.1} parent=11 // pred_fallthru
        _
      // Predicated region
      $region21: #{mbconv_forward.1} parent=11 // pred_check
        %p403 = pneg %p188
      $region22: #{mbconv_forward.1} parent=11 // pred_check_branch
        %405 = sbr.rel (%p403) target = $region24
      $region23: #{mbconv_forward.1} parent=11 // pred_region
        _
      $region24: #{mbconv_forward.1} parent=11 // pred_fallthru
        _
      // Predicated region
      $region25: #{mbconv_forward.1} parent=11 // pred_check
        %p406 = pneg %p209
      $region26: #{mbconv_forward.1} parent=11 // pred_check_branch
        %408 = sbr.rel (%p406) target = $region28
      $region27: #{mbconv_forward.1} parent=11 // pred_region
        _
      $region28: #{mbconv_forward.1} parent=11 // pred_fallthru
        _
      // Predicated region
      $region29: #{mbconv_forward.1} parent=11 // pred_check
        %p409 = pneg %p230
      $region30: #{mbconv_forward.1} parent=11 // pred_check_branch
        %411 = sbr.rel (%p409) target = $region32
      $region31: #{mbconv_forward.1} parent=11 // pred_region
        _
      $region32: #{mbconv_forward.1} parent=11 // pred_fallthru
        _
      // Predicated region
      $region33: #{mbconv_forward.1} parent=11 // pred_check
        %p412 = pneg %p251
      $region34: #{mbconv_forward.1} parent=11 // pred_check_branch
        %414 = sbr.rel (%p412) target = $region36
      $region35: #{mbconv_forward.1} parent=11 // pred_region
        _
      $region36: #{mbconv_forward.1} parent=11 // pred_fallthru
        _
      // Predicated region
      $region37: #{mbconv_forward.1} parent=11 // pred_check
        %p415 = pneg %p272
      $region38: #{mbconv_forward.1} parent=11 // pred_check_branch
        %417 = sbr.rel (%p415) target = $region40
      $region39: #{mbconv_forward.1} parent=11 // pred_region
        _
      $region40: #{mbconv_forward.1} parent=11 // pred_fallthru
        _
      // Predicated region
      $region41: #{mbconv_forward.1} parent=11 // pred_check
        %p418 = pneg %p293
      $region42: #{mbconv_forward.1} parent=11 // pred_check_branch
        %420 = sbr.rel (%p418) target = $region44
      $region43: #{mbconv_forward.1} parent=11 // pred_region
        _
      $region44: #{mbconv_forward.1} parent=11 // pred_fallthru
        _
      // Predicated region
      $region45: #{mbconv_forward.1} parent=11 // pred_check
        %p421 = pneg %p314
      $region46: #{mbconv_forward.1} parent=11 // pred_check_branch
        %423 = sbr.rel (%p421) target = $region48
      $region47: #{mbconv_forward.1} parent=11 // pred_region
        _
      $region48: #{mbconv_forward.1} parent=11 // pred_fallthru
        _
      // Predicated region
      $region49: #{mbconv_forward.1} parent=11 // pred_check
        %p424 = pneg %p335
      $region50: #{mbconv_forward.1} parent=11 // pred_check_branch
        %426 = sbr.rel (%p424) target = $region52
      $region51: #{mbconv_forward.1} parent=11 // pred_region
        _
      $region52: #{mbconv_forward.1} parent=11 // pred_fallthru
        _
      // Predicated region
      $region53: #{mbconv_forward.1} parent=11 // pred_check
        %p427 = pneg %p356
      $region54: #{mbconv_forward.1} parent=11 // pred_check_branch
        %429 = sbr.rel (%p427) target = $region56
      $region55: #{mbconv_forward.1} parent=11 // pred_region
        _
      $region56: #{mbconv_forward.1} parent=11 // pred_fallthru
        _
    $region12: #{mbconv_forward.1} parent=5 // pred_fallthru
      _
    %p430 = scmp.lt.s32.totalorder %s21, 2
    // Predicated region
    $region57: #{mbconv_forward.1} parent=5 // pred_check
      %p431 = pneg %p430
    $region58: #{mbconv_forward.1} parent=5 // pred_check_branch
      %433 = sbr.rel (%p431) target = $region60
    $region59: #{mbconv_forward.1} parent=5 // pred_region
      // Predicated region
      $region61: #{mbconv_forward.1} parent=59 // pred_check
        %p434 = pneg %p41
      $region62: #{mbconv_forward.1} parent=59 // pred_check_branch
        %436 = sbr.rel (%p434) target = $region64
      $region63: #{mbconv_forward.1} parent=59 // pred_region
        %p437 = scmp.lt.s32.totalorder %s21, 1
        %s438 = scalar_select %p437, %s21, 1
        %s439 = smul.addr %s438, 8
        %s440 = smul.addr %s439, 8
        %s441 = scalar_lea.vmem %s0, %s440
      $region64: #{mbconv_forward.1} parent=59 // pred_fallthru
        _
      // Predicated region
      $region65: #{mbconv_forward.1} parent=59 // pred_check
        %p442 = pneg %p67
      $region66: #{mbconv_forward.1} parent=59 // pred_check_branch
        %444 = sbr.rel (%p442) target = $region68
      $region67: #{mbconv_forward.1} parent=59 // pred_region
        %p445 = scmp.lt.s32.totalorder %s21, 1
        %s446 = scalar_select %p445, %s21, 1
        %s447 = smul.addr %s446, 18
        %s448 = smul.addr %s447, 8
        %s449 = scalar_lea.vmem %s1, %s448
      $region68: #{mbconv_forward.1} parent=59 // pred_fallthru
        _
      // Predicated region
      $region69: #{mbconv_forward.1} parent=59 // pred_check
        %p450 = pneg %p93
      $region70: #{mbconv_forward.1} parent=59 // pred_check_branch
        %452 = sbr.rel (%p450) target = $region72
      $region71: #{mbconv_forward.1} parent=59 // pred_region
        %p453 = scmp.lt.s32.totalorder %s21, 1
        %s454 = scalar_select %p453, %s21, 1
        %s455 = smul.addr %s454, 9
        %s456 = smul.addr %s455, 8
        %s457 = scalar_lea.vmem %s2, %s456
      $region72: #{mbconv_forward.1} parent=59 // pred_fallthru
        _
      // Predicated region
      $region73: #{mbconv_forward.1} parent=59 // pred_check
        %p458 = pneg %p119
      $region74: #{mbconv_forward.1} parent=59 // pred_check_branch
        %460 = sbr.rel (%p458) target = $region76
      $region75: #{mbconv_forward.1} parent=59 // pred_region
        %p461 = scmp.lt.s32.totalorder %s21, 1
        %s462 = scalar_select %p461, %s21, 1
        %s463 = smul.addr %s462, 16
        %s464 = smul.addr %s463, 8
        %s465 = scalar_lea.vmem %s3, %s464
      $region76: #{mbconv_forward.1} parent=59 // pred_fallthru
        _
    $region60: #{mbconv_forward.1} parent=5 // pred_fallthru
      _
    %p466 = scmp.le.s32.totalorder 1, %s21
    %p467 = scmp.lt.s32.totalorder %s21, 3
    %p468 = pnand %p466, %p467
    %p469 = pneg %p468
    // Predicated region
    $region77: #{mbconv_forward.1} parent=5 // pred_check
      _
    $region78: #{mbconv_forward.1} parent=5 // pred_check_branch
      %471 = sbr.rel (%p468) target = $region80
    $region79: #{mbconv_forward.1} parent=5 // pred_region
      %s472 = ssub.s32 %s21, 1
      %p473 = scmp.lt.s32.totalorder %s26, 1
      %s474 = scalar_select %p473, %s26, 1
      %s475 = smul.addr %s474, 8
      %s476 = smul.addr %s475, 8
      %s477 = scalar_lea.vmem %s0, %s476
      %p478 = pneg %p47
      %p479 = pneg %p44
      %p480 = scmp.lt.s32.totalorder %s26, 1
      %s481 = scalar_select %p480, %s26, 1
      %s482 = smul.addr %s481, 18
      %s483 = smul.addr %s482, 8
      %s484 = scalar_lea.vmem %s1, %s483
      %p485 = pneg %p73
      %p486 = pneg %p70
      %p487 = scmp.lt.s32.totalorder %s26, 1
      %s488 = scalar_select %p487, %s26, 1
      %s489 = smul.addr %s488, 9
      %s490 = smul.addr %s489, 8
      %s491 = scalar_lea.vmem %s2, %s490
      %p492 = pneg %p99
      %p493 = pneg %p96
      %p494 = scmp.lt.s32.totalorder %s26, 1
      %s495 = scalar_select %p494, %s26, 1
      %s496 = smul.addr %s495, 16
      %s497 = smul.addr %s496, 8
      %s498 = scalar_lea.vmem %s3, %s497
      %p499 = pneg %p125
      %p500 = pneg %p122
      %p501 = pneg %p146
      %p502 = pneg %p143
      %p503 = pneg %p167
      %p504 = pneg %p164
      %p505 = pneg %p188
      %p506 = pneg %p185
      %p507 = pneg %p209
      %p508 = pneg %p206
      %p509 = pneg %p230
      %p510 = pneg %p227
      %p511 = pneg %p251
      %p512 = pneg %p248
      %p513 = pneg %p272
      %p514 = pneg %p269
      %p515 = pneg %p293
      %p516 = pneg %p290
      %p517 = pneg %p314
      %p518 = pneg %p311
      %p519 = pneg %p335
      %p520 = pneg %p332
      %p521 = pneg %p356
      %p522 = pneg %p353
      %p523 = pneg %p382
      %p524 = pneg %p379
      %p525 = scmp.lt.s32.totalorder %s26, 1
      %s526 = scalar_select %p525, %s26, 1
      %s527 = smul.addr %s526, 8
      %s528 = smul.addr %s527, 8
      %s529 = scalar_lea.vmem %s15, %s528
      %p530 = scmp.lt.s32.totalorder %s26, 1
      %s531 = scalar_select %p530, %s26, 1
      %s532 = smul.addr %s531, 8
      %s533 = smul.addr %s532, 8
      %s534 = scalar_lea.vmem %s0, %s533
      %p535 = scmp.lt.s32.totalorder %s26, 1
      %s536 = scalar_select %p535, %s26, 1
      %s537 = smul.addr %s536, 18
      %s538 = smul.addr %s537, 8
      %s539 = scalar_lea.vmem %s1, %s538
      %p540 = scmp.lt.s32.totalorder %s26, 1
      %s541 = scalar_select %p540, %s26, 1
      %s542 = smul.addr %s541, 9
      %s543 = smul.addr %s542, 8
      %s544 = scalar_lea.vmem %s2, %s543
      %p545 = scmp.lt.s32.totalorder %s26, 1
      %s546 = scalar_select %p545, %s26, 1
      %s547 = smul.addr %s546, 16
      %s548 = smul.addr %s547, 8
      %s549 = scalar_lea.vmem %s3, %s548
      %p550 = scmp.lt.s32.totalorder %s26, 1
      %s551 = scalar_select %p550, %s26, 1
      %s552 = smul.addr %s551, 8
      %s553 = smul.addr %s552, 8
      %s554 = scalar_lea.vmem %s15, %s553
      %v555 = vld [vmem:[%s534] sm:$0xff]
      %v556 = vld [vmem:[%s534 + $0x8] sm:$0xff]
      %v557 = vld [vmem:[%s534 + $0x10] sm:$0xff]
      %v558 = vld [vmem:[%s534 + $0x18] sm:$0xff]
      %v559 = vld [vmem:[%s534 + $0x20] sm:$0xff]
      %v560 = vld [vmem:[%s534 + $0x28] sm:$0xff]
      %v561 = vld [vmem:[%s534 + $0x30] sm:$0xff]
      %v562 = vld [vmem:[%s534 + $0x38] sm:$0xff]
      %v563 = vld [vmem:[%s4] sm:$0xf]
      %v564 = vld [vmem:[%s5] sm:$0x1]
      %v566 = vlaneseq
      %v567 = vshrl.u32 %v566, 7
      %v568 = vsub.s32 0, %v567
      %v569 = vrot.slane %v564, %v568
      %vm571 = vcmask 31744
      %v573 = vsel %vm571, %v555, 0
      %v576 = vsel %vm571, %v556, 0
      %v579 = vsel %vm571, %v557, 0
      %v582 = vsel %vm571, %v558, 0
      %v585 = vsel %vm571, %v559, 0
      %v588 = vsel %vm571, %v560, 0
      %v591 = vsel %vm571, %v561, 0
      %v594 = vsel %vm571, %v562, 0
      %vm596 = vcmask 1043456
      %v598 = vsel %vm596, %v563, 0
      %600 = vmatprep.subr.mxu0 0.0
      %601 = vmatpush1.msra.mxu0 %v598
      %602 = vmatprep.subr.mxu0 0.0
      %603 = vmatpush1.msra.mxu0 0.0
      %604 = vmatprep.subr.mxu0 0.0
      %605 = vmatpush1.msra.mxu0 0.0
      %606 = vmatprep.subr.mxu0 0.0
      %607 = vmatpush1.msra.mxu0 0.0
      %608 = vmatprep.subr.mxu0 0.0
      %609 = vmatpush1.msra.mxu0 0.0
      %610 = vmatprep.subr.mxu0 0.0
      %611 = vmatpush1.msra.mxu0 0.0
      %612 = vmatprep.subr.mxu0 0.0
      %613 = vmatpush1.msra.mxu0 0.0
      %614 = vmatprep.subr.mxu0 0.0
      %615 = vmatpush1.msra.mxu0 0.0
      %616 = vmatprep.subr.mxu0 0.0
      %617 = vmatpush1.msra.mxu0 0.0
      %618 = vmatprep.subr.mxu0 0.0
      %619 = vmatpush1.msra.mxu0 0.0
      %620 = vmatprep.subr.mxu0 0.0
      %621 = vmatpush1.msra.mxu0 0.0
      %622 = vmatprep.subr.mxu0 0.0
      %623 = vmatpush1.msra.mxu0 0.0
      %624 = vmatprep.subr.mxu0 0.0
      %625 = vmatpush1.msra.mxu0 0.0
      %626 = vmatprep.subr.mxu0 0.0
      %627 = vmatpush1.msra.mxu0 0.0
      %628 = vmatprep.subr.mxu0 0.0
      %629 = vmatpush1.msra.mxu0 0.0
      %630 = vmatprep.subr.mxu0 0.0
      %631 = vmatpush1.msra.mxu0 0.0
      %632 = vmatprep.subr.mxu0 0.0
      %633 = vmatpush1.msra.mxu0 0.0
      %634 = vmatprep.subr.mxu0 0.0
      %635 = vmatpush1.msra.mxu0 0.0
      %636 = vmatprep.subr.mxu0 0.0
      %637 = vmatpush1.msra.mxu0 0.0
      %638 = vmatprep.subr.mxu0 0.0
      %639 = vmatpush1.msra.mxu0 0.0
      %640 = vmatprep.subr.mxu0 0.0
      %641 = vmatpush1.msra.mxu0 0.0
      %642 = vmatprep.subr.mxu0 0.0
      %643 = vmatpush1.msra.mxu0 0.0
      %644 = vmatprep.subr.mxu0 0.0
      %645 = vmatpush1.msra.mxu0 0.0
      %646 = vmatprep.subr.mxu0 0.0
      %647 = vmatpush1.msra.mxu0 0.0
      %648 = vmatprep.subr.mxu0 0.0
      %649 = vmatpush1.msra.mxu0 0.0
      %650 = vmatprep.subr.mxu0 0.0
      %651 = vmatpush1.msra.mxu0 0.0
      %652 = vmatprep.subr.mxu0 0.0
      %653 = vmatpush1.msra.mxu0 0.0
      %654 = vmatprep.subr.mxu0 0.0
      %655 = vmatpush1.msra.mxu0 0.0
      %656 = vmatprep.subr.mxu0 0.0
      %657 = vmatpush1.msra.mxu0 0.0
      %658 = vmatprep.subr.mxu0 0.0
      %659 = vmatpush1.msra.mxu0 0.0
      %660 = vmatprep.subr.mxu0 0.0
      %661 = vmatpush1.msra.mxu0 0.0
      %662 = vmatprep.subr.mxu0 0.0
      %663 = vmatpush1.msra.mxu0 0.0
      %664 = vmatprep.mubr.f32.mxu0 0.0
      %665 = vmatmul.mubr.f32.gmra.mrb[0].mxu0 %v573
      %v666 = vpop.f32.mrb[0].mxu0
      %v667 = vadd.f32 %v569, %v666
      %v668 = vpop.f32.mrb[0].mxu0
      %669 = vmatprep.mubr.f32.mxu0 0.0
      %670 = vmatmul.mubr.f32.gmra.mrb[0].mxu0 %v576
      %v671 = vpop.f32.mrb[0].mxu0
      %v672 = vadd.f32 %v569, %v671
      %v673 = vpop.f32.mrb[0].mxu0
      %674 = vmatprep.mubr.f32.mxu0 0.0
      %675 = vmatmul.mubr.f32.gmra.mrb[0].mxu0 %v579
      %v676 = vpop.f32.mrb[0].mxu0
      %v677 = vadd.f32 %v569, %v676
      %v678 = vpop.f32.mrb[0].mxu0
      %679 = vmatprep.mubr.f32.mxu0 0.0
      %680 = vmatmul.mubr.f32.gmra.mrb[0].mxu0 %v582
      %v681 = vpop.f32.mrb[0].mxu0
      %v682 = vadd.f32 %v569, %v681
      %v683 = vpop.f32.mrb[0].mxu0
      %684 = vmatprep.mubr.f32.mxu0 0.0
      %685 = vmatmul.mubr.f32.gmra.mrb[0].mxu0 %v585
      %v686 = vpop.f32.mrb[0].mxu0
      %v687 = vadd.f32 %v569, %v686
      %v688 = vpop.f32.mrb[0].mxu0
      %689 = vmatprep.mubr.f32.mxu0 0.0
      %690 = vmatmul.mubr.f32.gmra.mrb[0].mxu0 %v588
      %v691 = vpop.f32.mrb[0].mxu0
      %v692 = vadd.f32 %v569, %v691
      %v693 = vpop.f32.mrb[0].mxu0
      %694 = vmatprep.mubr.f32.mxu0 0.0
      %695 = vmatmul.mubr.f32.gmra.mrb[0].mxu0 %v591
      %v696 = vpop.f32.mrb[0].mxu0
      %v697 = vadd.f32 %v569, %v696
      %v698 = vpop.f32.mrb[0].mxu0
      %699 = vmatprep.mubr.f32.mxu0 0.0
      %700 = vmatmul.mubr.f32.gmra.mrb[0].mxu0 %v594
      %v701 = vpop.f32.mrb[0].mxu0
      %v702 = vadd.f32 %v569, %v701
      %v703 = vpop.f32.mrb[0].mxu0
      %704 = vdwg.mxu0
      %v705 = vmul.f32 %v667, 0.5
      %v706 = vmul.f32 %v672, 0.5
      %v707 = vmul.f32 %v677, 0.5
      %v708 = vmul.f32 %v682, 0.5
      %v709 = vmul.f32 %v687, 0.5
      %v710 = vmul.f32 %v692, 0.5
      %v711 = vmul.f32 %v697, 0.5
      %v712 = vmul.f32 %v702, 0.5
      %v713 = vmul.f32 %v667, 0.70710677
      %v714 = vmul.f32 %v672, 0.70710677
      %v715 = vmul.f32 %v677, 0.70710677
      %v716 = vmul.f32 %v682, 0.70710677
      %v717 = vmul.f32 %v687, 0.70710677
      %v718 = vmul.f32 %v692, 0.70710677
      %v719 = vmul.f32 %v697, 0.70710677
      %v720 = vmul.f32 %v702, 0.70710677
      %vm721 = vcmp.lt.f32.partialorder %v713, 0.0
      %vm722 = vcmp.lt.f32.partialorder %v714, 0.0
      %vm723 = vcmp.lt.f32.partialorder %v715, 0.0
      %vm724 = vcmp.lt.f32.partialorder %v716, 0.0
      %vm725 = vcmp.lt.f32.partialorder %v717, 0.0
      %vm726 = vcmp.lt.f32.partialorder %v718, 0.0
      %vm727 = vcmp.lt.f32.partialorder %v719, 0.0
      %vm728 = vcmp.lt.f32.partialorder %v720, 0.0
      %v729 = vsel %vm721, -1.0, 1.0
      %v730 = vsel %vm722, -1.0, 1.0
      %v731 = vsel %vm723, -1.0, 1.0
      %v732 = vsel %vm724, -1.0, 1.0
      %v733 = vsel %vm725, -1.0, 1.0
      %v734 = vsel %vm726, -1.0, 1.0
      %v735 = vsel %vm727, -1.0, 1.0
      %v736 = vsel %vm728, -1.0, 1.0
      %v737 = vand.u32 2147483647, %v713
      %v738 = vand.u32 2147483647, %v714
      %v739 = vand.u32 2147483647, %v715
      %v740 = vand.u32 2147483647, %v716
      %v741 = vand.u32 2147483647, %v717
      %v742 = vand.u32 2147483647, %v718
      %v743 = vand.u32 2147483647, %v719
      %v744 = vand.u32 2147483647, %v720
      %v745 = vmul.f32 %v737, 0.3275911
      %v746 = vmul.f32 %v738, 0.3275911
      %v747 = vmul.f32 %v739, 0.3275911
      %v748 = vmul.f32 %v740, 0.3275911
      %v749 = vmul.f32 %v741, 0.3275911
      %v750 = vmul.f32 %v742, 0.3275911
      %v751 = vmul.f32 %v743, 0.3275911
      %v752 = vmul.f32 %v744, 0.3275911
      %v753 = vadd.f32 %v745, 1.0
      %v754 = vadd.f32 %v746, 1.0
      %v755 = vadd.f32 %v747, 1.0
      %v756 = vadd.f32 %v748, 1.0
      %v757 = vadd.f32 %v749, 1.0
      %v758 = vadd.f32 %v750, 1.0
      %v759 = vadd.f32 %v751, 1.0
      %v760 = vadd.f32 %v752, 1.0
      %v761 = vrcp.pop %v753
      %v762 = vrcp.pop %v754
      %v763 = vrcp.pop %v755
      %v764 = vrcp.pop %v756
      %v765 = vrcp.pop %v757
      %v766 = vrcp.pop %v758
      %v767 = vrcp.pop %v759
      %v768 = vrcp.pop %v760
      %v769 = vmul.f32 %v761, 1.0614054
      %v770 = vmul.f32 %v762, 1.0614054
      %v771 = vmul.f32 %v763, 1.0614054
      %v772 = vmul.f32 %v764, 1.0614054
      %v773 = vmul.f32 %v765, 1.0614054
      %v774 = vmul.f32 %v766, 1.0614054
      %v775 = vmul.f32 %v767, 1.0614054
      %v776 = vmul.f32 %v768, 1.0614054
      %v777 = vadd.f32 %v769, -1.4531521
      %v778 = vadd.f32 %v770, -1.4531521
      %v779 = vadd.f32 %v771, -1.4531521
      %v780 = vadd.f32 %v772, -1.4531521
      %v781 = vadd.f32 %v773, -1.4531521
      %v782 = vadd.f32 %v774, -1.4531521
      %v783 = vadd.f32 %v775, -1.4531521
      %v784 = vadd.f32 %v776, -1.4531521
      %v785 = vmul.f32 %v777, %v761
      %v786 = vmul.f32 %v778, %v762
      %v787 = vmul.f32 %v779, %v763
      %v788 = vmul.f32 %v780, %v764
      %v789 = vmul.f32 %v781, %v765
      %v790 = vmul.f32 %v782, %v766
      %v791 = vmul.f32 %v783, %v767
      %v792 = vmul.f32 %v784, %v768
      %v793 = vadd.f32 %v785, 1.4214138
      %v794 = vadd.f32 %v786, 1.4214138
      %v795 = vadd.f32 %v787, 1.4214138
      %v796 = vadd.f32 %v788, 1.4214138
      %v797 = vadd.f32 %v789, 1.4214138
      %v798 = vadd.f32 %v790, 1.4214138
      %v799 = vadd.f32 %v791, 1.4214138
      %v800 = vadd.f32 %v792, 1.4214138
      %v801 = vmul.f32 %v793, %v761
      %v802 = vmul.f32 %v794, %v762
      %v803 = vmul.f32 %v795, %v763
      %v804 = vmul.f32 %v796, %v764
      %v805 = vmul.f32 %v797, %v765
      %v806 = vmul.f32 %v798, %v766
      %v807 = vmul.f32 %v799, %v767
      %v808 = vmul.f32 %v800, %v768
      %v809 = vadd.f32 %v801, -0.28449672
      %v810 = vadd.f32 %v802, -0.28449672
      %v811 = vadd.f32 %v803, -0.28449672
      %v812 = vadd.f32 %v804, -0.28449672
      %v813 = vadd.f32 %v805, -0.28449672
      %v814 = vadd.f32 %v806, -0.28449672
      %v815 = vadd.f32 %v807, -0.28449672
      %v816 = vadd.f32 %v808, -0.28449672
      %v817 = vmul.f32 %v809, %v761
      %v818 = vmul.f32 %v810, %v762
      %v819 = vmul.f32 %v811, %v763
      %v820 = vmul.f32 %v812, %v764
      %v821 = vmul.f32 %v813, %v765
      %v822 = vmul.f32 %v814, %v766
      %v823 = vmul.f32 %v815, %v767
      %v824 = vmul.f32 %v816, %v768
      %v825 = vadd.f32 %v817, 0.2548296
      %v826 = vadd.f32 %v818, 0.2548296
      %v827 = vadd.f32 %v819, 0.2548296
      %v828 = vadd.f32 %v820, 0.2548296
      %v829 = vadd.f32 %v821, 0.2548296
      %v830 = vadd.f32 %v822, 0.2548296
      %v831 = vadd.f32 %v823, 0.2548296
      %v832 = vadd.f32 %v824, 0.2548296
      %v833 = vmul.f32 %v825, %v761
      %v834 = vmul.f32 %v826, %v762
      %v835 = vmul.f32 %v827, %v763
      %v836 = vmul.f32 %v828, %v764
      %v837 = vmul.f32 %v829, %v765
      %v838 = vmul.f32 %v830, %v766
      %v839 = vmul.f32 %v831, %v767
      %v840 = vmul.f32 %v832, %v768
      %v841 = vsub.f32 0.0, %v737
      %v842 = vsub.f32 0.0, %v738
      %v843 = vsub.f32 0.0, %v739
      %v844 = vsub.f32 0.0, %v740
      %v845 = vsub.f32 0.0, %v741
      %v846 = vsub.f32 0.0, %v742
      %v847 = vsub.f32 0.0, %v743
      %v848 = vsub.f32 0.0, %v744
      %v849 = vmul.f32 %v841, %v737
      %v850 = vmul.f32 %v842, %v738
      %v851 = vmul.f32 %v843, %v739
      %v852 = vmul.f32 %v844, %v740
      %v853 = vmul.f32 %v845, %v741
      %v854 = vmul.f32 %v846, %v742
      %v855 = vmul.f32 %v847, %v743
      %v856 = vmul.f32 %v848, %v744
      %v857 = vmul.f32 %v849, 1.442695
      %v858 = vpow.pop %v857
      %v859 = vmul.f32 %v850, 1.442695
      %v860 = vpow.pop %v859
      %v861 = vmul.f32 %v851, 1.442695
      %v862 = vpow.pop %v861
      %v863 = vmul.f32 %v852, 1.442695
      %v864 = vpow.pop %v863
      %v865 = vmul.f32 %v853, 1.442695
      %v866 = vpow.pop %v865
      %v867 = vmul.f32 %v854, 1.442695
      %v868 = vpow.pop %v867
      %v869 = vmul.f32 %v855, 1.442695
      %v870 = vpow.pop %v869
      %v871 = vmul.f32 %v856, 1.442695
      %v872 = vpow.pop %v871
      %v873 = vmul.f32 %v833, %v858
      %v874 = vmul.f32 %v834, %v860
      %v875 = vmul.f32 %v835, %v862
      %v876 = vmul.f32 %v836, %v864
      %v877 = vmul.f32 %v837, %v866
      %v878 = vmul.f32 %v838, %v868
      %v879 = vmul.f32 %v839, %v870
      %v880 = vmul.f32 %v840, %v872
      %v881 = vsub.f32 1.0, %v873
      %v882 = vsub.f32 1.0, %v874
      %v883 = vsub.f32 1.0, %v875
      %v884 = vsub.f32 1.0, %v876
      %v885 = vsub.f32 1.0, %v877
      %v886 = vsub.f32 1.0, %v878
      %v887 = vsub.f32 1.0, %v879
      %v888 = vsub.f32 1.0, %v880
      %v889 = vmul.f32 %v729, %v881
      %v890 = vmul.f32 %v730, %v882
      %v891 = vmul.f32 %v731, %v883
      %v892 = vmul.f32 %v732, %v884
      %v893 = vmul.f32 %v733, %v885
      %v894 = vmul.f32 %v734, %v886
      %v895 = vmul.f32 %v735, %v887
      %v896 = vmul.f32 %v736, %v888
      %v897 = vadd.f32 %v889, 1.0
      %v898 = vadd.f32 %v890, 1.0
      %v899 = vadd.f32 %v891, 1.0
      %v900 = vadd.f32 %v892, 1.0
      %v901 = vadd.f32 %v893, 1.0
      %v902 = vadd.f32 %v894, 1.0
      %v903 = vadd.f32 %v895, 1.0
      %v904 = vadd.f32 %v896, 1.0
      %v905 = vmul.f32 %v705, %v897
      %v906 = vmul.f32 %v706, %v898
      %v907 = vmul.f32 %v707, %v899
      %v908 = vmul.f32 %v708, %v900
      %v909 = vmul.f32 %v709, %v901
      %v910 = vmul.f32 %v710, %v902
      %v911 = vmul.f32 %v711, %v903
      %v912 = vmul.f32 %v712, %v904
      %vm913 = vcmask 130048
      %914 = vst.msk [vmem:[#allocation2] sm:$0xff] %vm913, 0.0
      %vm915 = vcmask 123904
      %916 = vst.msk [vmem:[#allocation2 + $0x8] sm:$0x3] %vm915, 0.0
      %s917 = scalar_lea.vmem [#allocation2], 144
      %918 = vst.msk [vmem:[%s917] sm:$0xff] %vm913, 0.0
      %919 = vst.msk [vmem:[%s917 + $0x8] sm:$0x3] %vm915, 0.0
      %vm920 = vcmask 122880
      %921 = vst.msk [vmem:[#allocation2] sm:$0x1] %vm920, 0.0
      %922 = vst.msk [vmem:[#allocation2 + $0x10] sm:$0x1] %vm920, 0.0
      %923 = vst.msk [vmem:[#allocation2 + $0x20] sm:$0x1] %vm920, 0.0
      %924 = vst.msk [vmem:[#allocation2 + $0x30] sm:$0x1] %vm920, 0.0
      %925 = vst.msk [vmem:[#allocation2 + $0x40] sm:$0x1] %vm920, 0.0
      %926 = vst.msk [vmem:[#allocation2 + $0x50] sm:$0x1] %vm920, 0.0
      %927 = vst.msk [vmem:[#allocation2 + $0x60] sm:$0x1] %vm920, 0.0
      %928 = vst.msk [vmem:[#allocation2 + $0x70] sm:$0x1] %vm920, 0.0
      %929 = vst.msk [vmem:[#allocation2 + $0x80] sm:$0x1] %vm920, 0.0
      %930 = vst.msk [vmem:[#allocation2 + $0x90] sm:$0x1] %vm920, 0.0
      %931 = vst.msk [vmem:[#allocation2 + $0x9] sm:$0x1] %vm920, 0.0
      %932 = vst.msk [vmem:[#allocation2 + $0x19] sm:$0x1] %vm920, 0.0
      %933 = vst.msk [vmem:[#allocation2 + $0x29] sm:$0x1] %vm920, 0.0
      %934 = vst.msk [vmem:[#allocation2 + $0x39] sm:$0x1] %vm920, 0.0
      %935 = vst.msk [vmem:[#allocation2 + $0x49] sm:$0x1] %vm920, 0.0
      %936 = vst.msk [vmem:[#allocation2 + $0x59] sm:$0x1] %vm920, 0.0
      %937 = vst.msk [vmem:[#allocation2 + $0x69] sm:$0x1] %vm920, 0.0
      %938 = vst.msk [vmem:[#allocation2 + $0x79] sm:$0x1] %vm920, 0.0
      %939 = vst.msk [vmem:[#allocation2 + $0x89] sm:$0x1] %vm920, 0.0
      %940 = vst.msk [vmem:[#allocation2 + $0x99] sm:$0x1] %vm920, 0.0
      %s941 = scalar_lea.vmem [#allocation2], 16
      %942 = vst.msk [vmem:[%s941 + $0x1] sm:$0xff] %vm913, %v905
      %943 = vst.msk [vmem:[%s941 + $0x11] sm:$0xff] %vm913, %v906
      %944 = vst.msk [vmem:[%s941 + $0x21] sm:$0xff] %vm913, %v907
      %945 = vst.msk [vmem:[%s941 + $0x31] sm:$0xff] %vm913, %v908
      %946 = vst.msk [vmem:[%s941 + $0x41] sm:$0xff] %vm913, %v909
      %947 = vst.msk [vmem:[%s941 + $0x51] sm:$0xff] %vm913, %v910
      %948 = vst.msk [vmem:[%s941 + $0x61] sm:$0xff] %vm913, %v911
      %949 = vst.msk [vmem:[%s941 + $0x71] sm:$0xff] %vm913, %v912
      %v950 = vld [vmem:[%s6] sm:$0xff]
      %v951 = vld [vmem:[%s6 + $0x8] sm:$0x1]
      %v952 = vlaneseq
      %v953 = vshrl.u32 %v952, 7
      %v954 = vsub.s32 4, %v953
      %v955 = vrot.slane %v950, %v954
      %v956 = vmul.f32 %v955, %v905
      %v957 = vmul.f32 %v955, %v906
      %v958 = vmul.f32 %v955, %v907
      %v959 = vmul.f32 %v955, %v908
      %v960 = vmul.f32 %v955, %v909
      %v961 = vmul.f32 %v955, %v910
      %v962 = vmul.f32 %v955, %v911
      %v963 = vmul.f32 %v955, %v912
      %v964 = vld [vmem:[#allocation2] sm:$0xff]
      %v965 = vld [vmem:[#allocation2 + $0x10] sm:$0xff]
      %v966 = vld [vmem:[#allocation2 + $0x20] sm:$0xff]
      %v967 = vld [vmem:[#allocation2 + $0x30] sm:$0xff]
      %v968 = vld [vmem:[#allocation2 + $0x40] sm:$0xff]
      %v969 = vld [vmem:[#allocation2 + $0x50] sm:$0xff]
      %v970 = vld [vmem:[#allocation2 + $0x60] sm:$0xff]
      %v971 = vld [vmem:[#allocation2 + $0x70] sm:$0xff]
      %v972 = vlaneseq
      %v973 = vshrl.u32 %v972, 7
      %v974 = vsub.s32 0, %v973
      %v975 = vrot.slane %v950, %v974
      %v976 = vmul.f32 %v975, %v964
      %v977 = vmul.f32 %v975, %v965
      %v978 = vmul.f32 %v975, %v966
      %v979 = vmul.f32 %v975, %v967
      %v980 = vmul.f32 %v975, %v968
      %v981 = vmul.f32 %v975, %v969
      %v982 = vmul.f32 %v975, %v970
      %v983 = vmul.f32 %v975, %v971
      %v984 = vadd.f32 %v956, %v976
      %v985 = vadd.f32 %v957, %v977
      %v986 = vadd.f32 %v958, %v978
      %v987 = vadd.f32 %v959, %v979
      %v988 = vadd.f32 %v960, %v980
      %v989 = vadd.f32 %v961, %v981
      %v990 = vadd.f32 %v962, %v982
      %v991 = vadd.f32 %v963, %v983
      %v992 = vld [vmem:[#allocation2 + $0x1] sm:$0xff]
      %v993 = vld [vmem:[#allocation2 + $0x11] sm:$0xff]
      %v994 = vld [vmem:[#allocation2 + $0x21] sm:$0xff]
      %v995 = vld [vmem:[#allocation2 + $0x31] sm:$0xff]
      %v996 = vld [vmem:[#allocation2 + $0x41] sm:$0xff]
      %v997 = vld [vmem:[#allocation2 + $0x51] sm:$0xff]
      %v998 = vld [vmem:[#allocation2 + $0x61] sm:$0xff]
      %v999 = vld [vmem:[#allocation2 + $0x71] sm:$0xff]
      %v1000 = vlaneseq
      %v1001 = vshrl.u32 %v1000, 7
      %v1002 = vsub.s32 1, %v1001
      %v1003 = vrot.slane %v950, %v1002
      %v1004 = vmul.f32 %v1003, %v992
      %v1005 = vmul.f32 %v1003, %v993
      %v1006 = vmul.f32 %v1003, %v994
      %v1007 = vmul.f32 %v1003, %v995
      %v1008 = vmul.f32 %v1003, %v996
      %v1009 = vmul.f32 %v1003, %v997
      %v1010 = vmul.f32 %v1003, %v998
      %v1011 = vmul.f32 %v1003, %v999
      %v1012 = vadd.f32 %v984, %v1004
      %v1013 = vadd.f32 %v985, %v1005
      %v1014 = vadd.f32 %v986, %v1006
      %v1015 = vadd.f32 %v987, %v1007
      %v1016 = vadd.f32 %v988, %v1008
      %v1017 = vadd.f32 %v989, %v1009
      %v1018 = vadd.f32 %v990, %v1010
      %v1019 = vadd.f32 %v991, %v1011
      %v1020 = vld [vmem:[#allocation2 + $0x2] sm:$0xff]
      %v1021 = vld [vmem:[#allocation2 + $0x12] sm:$0xff]
      %v1022 = vld [vmem:[#allocation2 + $0x22] sm:$0xff]
      %v1023 = vld [vmem:[#allocation2 + $0x32] sm:$0xff]
      %v1024 = vld [vmem:[#allocation2 + $0x42] sm:$0xff]
      %v1025 = vld [vmem:[#allocation2 + $0x52] sm:$0xff]
      %v1026 = vld [vmem:[#allocation2 + $0x62] sm:$0xff]
      %v1027 = vld [vmem:[#allocation2 + $0x72] sm:$0xff]
      %v1028 = vlaneseq
      %v1029 = vshrl.u32 %v1028, 7
      %v1030 = vsub.s32 2, %v1029
      %v1031 = vrot.slane %v950, %v1030
      %v1032 = vmul.f32 %v1031, %v1020
      %v1033 = vmul.f32 %v1031, %v1021
      %v1034 = vmul.f32 %v1031, %v1022
      %v1035 = vmul.f32 %v1031, %v1023
      %v1036 = vmul.f32 %v1031, %v1024
      %v1037 = vmul.f32 %v1031, %v1025
      %v1038 = vmul.f32 %v1031, %v1026
      %v1039 = vmul.f32 %v1031, %v1027
      %v1040 = vadd.f32 %v1012, %v1032
      %v1041 = vadd.f32 %v1013, %v1033
      %v1042 = vadd.f32 %v1014, %v1034
      %v1043 = vadd.f32 %v1015, %v1035
      %v1044 = vadd.f32 %v1016, %v1036
      %v1045 = vadd.f32 %v1017, %v1037
      %v1046 = vadd.f32 %v1018, %v1038
      %v1047 = vadd.f32 %v1019, %v1039
      %v1048 = vld [vmem:[%s941] sm:$0xff]
      %v1049 = vld [vmem:[%s941 + $0x10] sm:$0xff]
      %v1050 = vld [vmem:[%s941 + $0x20] sm:$0xff]
      %v1051 = vld [vmem:[%s941 + $0x30] sm:$0xff]
      %v1052 = vld [vmem:[%s941 + $0x40] sm:$0xff]
      %v1053 = vld [vmem:[%s941 + $0x50] sm:$0xff]
      %v1054 = vld [vmem:[%s941 + $0x60] sm:$0xff]
      %v1055 = vld [vmem:[%s941 + $0x70] sm:$0xff]
      %v1056 = vlaneseq
      %v1057 = vshrl.u32 %v1056, 7
      %v1058 = vsub.s32 3, %v1057
      %v1059 = vrot.slane %v950, %v1058
      %v1060 = vmul.f32 %v1059, %v1048
      %v1061 = vmul.f32 %v1059, %v1049
      %v1062 = vmul.f32 %v1059, %v1050
      %v1063 = vmul.f32 %v1059, %v1051
      %v1064 = vmul.f32 %v1059, %v1052
      %v1065 = vmul.f32 %v1059, %v1053
      %v1066 = vmul.f32 %v1059, %v1054
      %v1067 = vmul.f32 %v1059, %v1055
      %v1068 = vadd.f32 %v1040, %v1060
      %v1069 = vadd.f32 %v1041, %v1061
      %v1070 = vadd.f32 %v1042, %v1062
      %v1071 = vadd.f32 %v1043, %v1063
      %v1072 = vadd.f32 %v1044, %v1064
      %v1073 = vadd.f32 %v1045, %v1065
      %v1074 = vadd.f32 %v1046, %v1066
      %v1075 = vadd.f32 %v1047, %v1067
      %v1076 = vld [vmem:[%s941 + $0x2] sm:$0xff]
      %v1077 = vld [vmem:[%s941 + $0x12] sm:$0xff]
      %v1078 = vld [vmem:[%s941 + $0x22] sm:$0xff]
      %v1079 = vld [vmem:[%s941 + $0x32] sm:$0xff]
      %v1080 = vld [vmem:[%s941 + $0x42] sm:$0xff]
      %v1081 = vld [vmem:[%s941 + $0x52] sm:$0xff]
      %v1082 = vld [vmem:[%s941 + $0x62] sm:$0xff]
      %v1083 = vld [vmem:[%s941 + $0x72] sm:$0xff]
      %v1084 = vlaneseq
      %v1085 = vshrl.u32 %v1084, 7
      %v1086 = vsub.s32 5, %v1085
      %v1087 = vrot.slane %v950, %v1086
      %v1088 = vmul.f32 %v1087, %v1076
      %v1089 = vmul.f32 %v1087, %v1077
      %v1090 = vmul.f32 %v1087, %v1078
      %v1091 = vmul.f32 %v1087, %v1079
      %v1092 = vmul.f32 %v1087, %v1080
      %v1093 = vmul.f32 %v1087, %v1081
      %v1094 = vmul.f32 %v1087, %v1082
      %v1095 = vmul.f32 %v1087, %v1083
      %v1096 = vadd.f32 %v1068, %v1088
      %v1097 = vadd.f32 %v1069, %v1089
      %v1098 = vadd.f32 %v1070, %v1090
      %v1099 = vadd.f32 %v1071, %v1091
      %v1100 = vadd.f32 %v1072, %v1092
      %v1101 = vadd.f32 %v1073, %v1093
      %v1102 = vadd.f32 %v1074, %v1094
      %v1103 = vadd.f32 %v1075, %v1095
      %s1104 = scalar_lea.vmem [#allocation2], 32
      %v1105 = vld [vmem:[%s1104] sm:$0xff]
      %v1106 = vld [vmem:[%s1104 + $0x10] sm:$0xff]
      %v1107 = vld [vmem:[%s1104 + $0x20] sm:$0xff]
      %v1108 = vld [vmem:[%s1104 + $0x30] sm:$0xff]
      %v1109 = vld [vmem:[%s1104 + $0x40] sm:$0xff]
      %v1110 = vld [vmem:[%s1104 + $0x50] sm:$0xff]
      %v1111 = vld [vmem:[%s1104 + $0x60] sm:$0xff]
      %v1112 = vld [vmem:[%s1104 + $0x70] sm:$0xff]
      %v1113 = vlaneseq
      %v1114 = vshrl.u32 %v1113, 7
      %v1115 = vsub.s32 6, %v1114
      %v1116 = vrot.slane %v950, %v1115
      %v1117 = vmul.f32 %v1116, %v1105
      %v1118 = vmul.f32 %v1116, %v1106
      %v1119 = vmul.f32 %v1116, %v1107
      %v1120 = vmul.f32 %v1116, %v1108
      %v1121 = vmul.f32 %v1116, %v1109
      %v1122 = vmul.f32 %v1116, %v1110
      %v1123 = vmul.f32 %v1116, %v1111
      %v1124 = vmul.f32 %v1116, %v1112
      %v1125 = vadd.f32 %v1096, %v1117
      %v1126 = vadd.f32 %v1097, %v1118
      %v1127 = vadd.f32 %v1098, %v1119
      %v1128 = vadd.f32 %v1099, %v1120
      %v1129 = vadd.f32 %v1100, %v1121
      %v1130 = vadd.f32 %v1101, %v1122
      %v1131 = vadd.f32 %v1102, %v1123
      %v1132 = vadd.f32 %v1103, %v1124
      %v1133 = vld [vmem:[%s1104 + $0x1] sm:$0xff]
      %v1134 = vld [vmem:[%s1104 + $0x11] sm:$0xff]
      %v1135 = vld [vmem:[%s1104 + $0x21] sm:$0xff]
      %v1136 = vld [vmem:[%s1104 + $0x31] sm:$0xff]
      %v1137 = vld [vmem:[%s1104 + $0x41] sm:$0xff]
      %v1138 = vld [vmem:[%s1104 + $0x51] sm:$0xff]
      %v1139 = vld [vmem:[%s1104 + $0x61] sm:$0xff]
      %v1140 = vld [vmem:[%s1104 + $0x71] sm:$0xff]
      %v1141 = vlaneseq
      %v1142 = vshrl.u32 %v1141, 7
      %v1143 = vsub.s32 7, %v1142
      %v1144 = vrot.slane %v950, %v1143
      %v1145 = vmul.f32 %v1144, %v1133
      %v1146 = vmul.f32 %v1144, %v1134
      %v1147 = vmul.f32 %v1144, %v1135
      %v1148 = vmul.f32 %v1144, %v1136
      %v1149 = vmul.f32 %v1144, %v1137
      %v1150 = vmul.f32 %v1144, %v1138
      %v1151 = vmul.f32 %v1144, %v1139
      %v1152 = vmul.f32 %v1144, %v1140
      %v1153 = vadd.f32 %v1125, %v1145
      %v1154 = vadd.f32 %v1126, %v1146
      %v1155 = vadd.f32 %v1127, %v1147
      %v1156 = vadd.f32 %v1128, %v1148
      %v1157 = vadd.f32 %v1129, %v1149
      %v1158 = vadd.f32 %v1130, %v1150
      %v1159 = vadd.f32 %v1131, %v1151
      %v1160 = vadd.f32 %v1132, %v1152
      %v1161 = vld [vmem:[%s1104 + $0x2] sm:$0xff]
      %v1162 = vld [vmem:[%s1104 + $0x12] sm:$0xff]
      %v1163 = vld [vmem:[%s1104 + $0x22] sm:$0xff]
      %v1164 = vld [vmem:[%s1104 + $0x32] sm:$0xff]
      %v1165 = vld [vmem:[%s1104 + $0x42] sm:$0xff]
      %v1166 = vld [vmem:[%s1104 + $0x52] sm:$0xff]
      %v1167 = vld [vmem:[%s1104 + $0x62] sm:$0xff]
      %v1168 = vld [vmem:[%s1104 + $0x72] sm:$0xff]
      %v1169 = vlaneseq
      %v1170 = vshrl.u32 %v1169, 7
      %v1171 = vsub.s32 0, %v1170
      %v1172 = vrot.slane %v951, %v1171
      %v1173 = vmul.f32 %v1172, %v1161
      %v1174 = vmul.f32 %v1172, %v1162
      %v1175 = vmul.f32 %v1172, %v1163
      %v1176 = vmul.f32 %v1172, %v1164
      %v1177 = vmul.f32 %v1172, %v1165
      %v1178 = vmul.f32 %v1172, %v1166
      %v1179 = vmul.f32 %v1172, %v1167
      %v1180 = vmul.f32 %v1172, %v1168
      %v1181 = vadd.f32 %v1153, %v1173
      %v1182 = vadd.f32 %v1154, %v1174
      %v1183 = vadd.f32 %v1155, %v1175
      %v1184 = vadd.f32 %v1156, %v1176
      %v1185 = vadd.f32 %v1157, %v1177
      %v1186 = vadd.f32 %v1158, %v1178
      %v1187 = vadd.f32 %v1159, %v1179
      %v1188 = vadd.f32 %v1160, %v1180
      %v1189 = vld [vmem:[%s7] sm:$0x1]
      %v1191 = vlaneseq
      %v1192 = vshrl.u32 %v1191, 7
      %v1193 = vsub.s32 0, %v1192
      %v1194 = vrot.slane %v1189, %v1193
      %v1196 = vadd.f32 %v1181, %v1194
      %v1197 = vadd.f32 %v1182, %v1194
      %v1198 = vadd.f32 %v1183, %v1194
      %v1199 = vadd.f32 %v1184, %v1194
      %v1200 = vadd.f32 %v1185, %v1194
      %v1201 = vadd.f32 %v1186, %v1194
      %v1202 = vadd.f32 %v1187, %v1194
      %v1203 = vadd.f32 %v1188, %v1194
      %v1204 = vmul.f32 %v1196, 0.5
      %v1205 = vmul.f32 %v1197, 0.5
      %v1206 = vmul.f32 %v1198, 0.5
      %v1207 = vmul.f32 %v1199, 0.5
      %v1208 = vmul.f32 %v1200, 0.5
      %v1209 = vmul.f32 %v1201, 0.5
      %v1210 = vmul.f32 %v1202, 0.5
      %v1211 = vmul.f32 %v1203, 0.5
      %v1212 = vmul.f32 %v1196, 0.70710677
      %v1213 = vmul.f32 %v1197, 0.70710677
      %v1214 = vmul.f32 %v1198, 0.70710677
      %v1215 = vmul.f32 %v1199, 0.70710677
      %v1216 = vmul.f32 %v1200, 0.70710677
      %v1217 = vmul.f32 %v1201, 0.70710677
      %v1218 = vmul.f32 %v1202, 0.70710677
      %v1219 = vmul.f32 %v1203, 0.70710677
      %vm1220 = vcmp.lt.f32.partialorder %v1212, 0.0
      %vm1221 = vcmp.lt.f32.partialorder %v1213, 0.0
      %vm1222 = vcmp.lt.f32.partialorder %v1214, 0.0
      %vm1223 = vcmp.lt.f32.partialorder %v1215, 0.0
      %vm1224 = vcmp.lt.f32.partialorder %v1216, 0.0
      %vm1225 = vcmp.lt.f32.partialorder %v1217, 0.0
      %vm1226 = vcmp.lt.f32.partialorder %v1218, 0.0
      %vm1227 = vcmp.lt.f32.partialorder %v1219, 0.0
      %v1228 = vsel %vm1220, -1.0, 1.0
      %v1229 = vsel %vm1221, -1.0, 1.0
      %v1230 = vsel %vm1222, -1.0, 1.0
      %v1231 = vsel %vm1223, -1.0, 1.0
      %v1232 = vsel %vm1224, -1.0, 1.0
      %v1233 = vsel %vm1225, -1.0, 1.0
      %v1234 = vsel %vm1226, -1.0, 1.0
      %v1235 = vsel %vm1227, -1.0, 1.0
      %v1236 = vand.u32 2147483647, %v1212
      %v1237 = vand.u32 2147483647, %v1213
      %v1238 = vand.u32 2147483647, %v1214
      %v1239 = vand.u32 2147483647, %v1215
      %v1240 = vand.u32 2147483647, %v1216
      %v1241 = vand.u32 2147483647, %v1217
      %v1242 = vand.u32 2147483647, %v1218
      %v1243 = vand.u32 2147483647, %v1219
      %v1244 = vmul.f32 %v1236, 0.3275911
      %v1245 = vmul.f32 %v1237, 0.3275911
      %v1246 = vmul.f32 %v1238, 0.3275911
      %v1247 = vmul.f32 %v1239, 0.3275911
      %v1248 = vmul.f32 %v1240, 0.3275911
      %v1249 = vmul.f32 %v1241, 0.3275911
      %v1250 = vmul.f32 %v1242, 0.3275911
      %v1251 = vmul.f32 %v1243, 0.3275911
      %v1252 = vadd.f32 %v1244, 1.0
      %v1253 = vadd.f32 %v1245, 1.0
      %v1254 = vadd.f32 %v1246, 1.0
      %v1255 = vadd.f32 %v1247, 1.0
      %v1256 = vadd.f32 %v1248, 1.0
      %v1257 = vadd.f32 %v1249, 1.0
      %v1258 = vadd.f32 %v1250, 1.0
      %v1259 = vadd.f32 %v1251, 1.0
      %v1260 = vrcp.pop %v1252
      %v1261 = vrcp.pop %v1253
      %v1262 = vrcp.pop %v1254
      %v1263 = vrcp.pop %v1255
      %v1264 = vrcp.pop %v1256
      %v1265 = vrcp.pop %v1257
      %v1266 = vrcp.pop %v1258
      %v1267 = vrcp.pop %v1259
      %v1268 = vmul.f32 %v1260, 1.0614054
      %v1269 = vmul.f32 %v1261, 1.0614054
      %v1270 = vmul.f32 %v1262, 1.0614054
      %v1271 = vmul.f32 %v1263, 1.0614054
      %v1272 = vmul.f32 %v1264, 1.0614054
      %v1273 = vmul.f32 %v1265, 1.0614054
      %v1274 = vmul.f32 %v1266, 1.0614054
      %v1275 = vmul.f32 %v1267, 1.0614054
      %v1276 = vadd.f32 %v1268, -1.4531521
      %v1277 = vadd.f32 %v1269, -1.4531521
      %v1278 = vadd.f32 %v1270, -1.4531521
      %v1279 = vadd.f32 %v1271, -1.4531521
      %v1280 = vadd.f32 %v1272, -1.4531521
      %v1281 = vadd.f32 %v1273, -1.4531521
      %v1282 = vadd.f32 %v1274, -1.4531521
      %v1283 = vadd.f32 %v1275, -1.4531521
      %v1284 = vmul.f32 %v1276, %v1260
      %v1285 = vmul.f32 %v1277, %v1261
      %v1286 = vmul.f32 %v1278, %v1262
      %v1287 = vmul.f32 %v1279, %v1263
      %v1288 = vmul.f32 %v1280, %v1264
      %v1289 = vmul.f32 %v1281, %v1265
      %v1290 = vmul.f32 %v1282, %v1266
      %v1291 = vmul.f32 %v1283, %v1267
      %v1292 = vadd.f32 %v1284, 1.4214138
      %v1293 = vadd.f32 %v1285, 1.4214138
      %v1294 = vadd.f32 %v1286, 1.4214138
      %v1295 = vadd.f32 %v1287, 1.4214138
      %v1296 = vadd.f32 %v1288, 1.4214138
      %v1297 = vadd.f32 %v1289, 1.4214138
      %v1298 = vadd.f32 %v1290, 1.4214138
      %v1299 = vadd.f32 %v1291, 1.4214138
      %v1300 = vmul.f32 %v1292, %v1260
      %v1301 = vmul.f32 %v1293, %v1261
      %v1302 = vmul.f32 %v1294, %v1262
      %v1303 = vmul.f32 %v1295, %v1263
      %v1304 = vmul.f32 %v1296, %v1264
      %v1305 = vmul.f32 %v1297, %v1265
      %v1306 = vmul.f32 %v1298, %v1266
      %v1307 = vmul.f32 %v1299, %v1267
      %v1308 = vadd.f32 %v1300, -0.28449672
      %v1309 = vadd.f32 %v1301, -0.28449672
      %v1310 = vadd.f32 %v1302, -0.28449672
      %v1311 = vadd.f32 %v1303, -0.28449672
      %v1312 = vadd.f32 %v1304, -0.28449672
      %v1313 = vadd.f32 %v1305, -0.28449672
      %v1314 = vadd.f32 %v1306, -0.28449672
      %v1315 = vadd.f32 %v1307, -0.28449672
      %v1316 = vmul.f32 %v1308, %v1260
      %v1317 = vmul.f32 %v1309, %v1261
      %v1318 = vmul.f32 %v1310, %v1262
      %v1319 = vmul.f32 %v1311, %v1263
      %v1320 = vmul.f32 %v1312, %v1264
      %v1321 = vmul.f32 %v1313, %v1265
      %v1322 = vmul.f32 %v1314, %v1266
      %v1323 = vmul.f32 %v1315, %v1267
      %v1324 = vadd.f32 %v1316, 0.2548296
      %v1325 = vadd.f32 %v1317, 0.2548296
      %v1326 = vadd.f32 %v1318, 0.2548296
      %v1327 = vadd.f32 %v1319, 0.2548296
      %v1328 = vadd.f32 %v1320, 0.2548296
      %v1329 = vadd.f32 %v1321, 0.2548296
      %v1330 = vadd.f32 %v1322, 0.2548296
      %v1331 = vadd.f32 %v1323, 0.2548296
      %v1332 = vmul.f32 %v1324, %v1260
      %v1333 = vmul.f32 %v1325, %v1261
      %v1334 = vmul.f32 %v1326, %v1262
      %v1335 = vmul.f32 %v1327, %v1263
      %v1336 = vmul.f32 %v1328, %v1264
      %v1337 = vmul.f32 %v1329, %v1265
      %v1338 = vmul.f32 %v1330, %v1266
      %v1339 = vmul.f32 %v1331, %v1267
      %v1340 = vsub.f32 0.0, %v1236
      %v1341 = vsub.f32 0.0, %v1237
      %v1342 = vsub.f32 0.0, %v1238
      %v1343 = vsub.f32 0.0, %v1239
      %v1344 = vsub.f32 0.0, %v1240
      %v1345 = vsub.f32 0.0, %v1241
      %v1346 = vsub.f32 0.0, %v1242
      %v1347 = vsub.f32 0.0, %v1243
      %v1348 = vmul.f32 %v1340, %v1236
      %v1349 = vmul.f32 %v1341, %v1237
      %v1350 = vmul.f32 %v1342, %v1238
      %v1351 = vmul.f32 %v1343, %v1239
      %v1352 = vmul.f32 %v1344, %v1240
      %v1353 = vmul.f32 %v1345, %v1241
      %v1354 = vmul.f32 %v1346, %v1242
      %v1355 = vmul.f32 %v1347, %v1243
      %v1356 = vmul.f32 %v1348, 1.442695
      %v1357 = vpow.pop %v1356
      %v1358 = vmul.f32 %v1349, 1.442695
      %v1359 = vpow.pop %v1358
      %v1360 = vmul.f32 %v1350, 1.442695
      %v1361 = vpow.pop %v1360
      %v1362 = vmul.f32 %v1351, 1.442695
      %v1363 = vpow.pop %v1362
      %v1364 = vmul.f32 %v1352, 1.442695
      %v1365 = vpow.pop %v1364
      %v1366 = vmul.f32 %v1353, 1.442695
      %v1367 = vpow.pop %v1366
      %v1368 = vmul.f32 %v1354, 1.442695
      %v1369 = vpow.pop %v1368
      %v1370 = vmul.f32 %v1355, 1.442695
      %v1371 = vpow.pop %v1370
      %v1372 = vmul.f32 %v1332, %v1357
      %v1373 = vmul.f32 %v1333, %v1359
      %v1374 = vmul.f32 %v1334, %v1361
      %v1375 = vmul.f32 %v1335, %v1363
      %v1376 = vmul.f32 %v1336, %v1365
      %v1377 = vmul.f32 %v1337, %v1367
      %v1378 = vmul.f32 %v1338, %v1369
      %v1379 = vmul.f32 %v1339, %v1371
      %v1380 = vsub.f32 1.0, %v1372
      %v1381 = vsub.f32 1.0, %v1373
      %v1382 = vsub.f32 1.0, %v1374
      %v1383 = vsub.f32 1.0, %v1375
      %v1384 = vsub.f32 1.0, %v1376
      %v1385 = vsub.f32 1.0, %v1377
      %v1386 = vsub.f32 1.0, %v1378
      %v1387 = vsub.f32 1.0, %v1379
      %v1388 = vmul.f32 %v1228, %v1380
      %v1389 = vmul.f32 %v1229, %v1381
      %v1390 = vmul.f32 %v1230, %v1382
      %v1391 = vmul.f32 %v1231, %v1383
      %v1392 = vmul.f32 %v1232, %v1384
      %v1393 = vmul.f32 %v1233, %v1385
      %v1394 = vmul.f32 %v1234, %v1386
      %v1395 = vmul.f32 %v1235, %v1387
      %v1396 = vadd.f32 %v1388, 1.0
      %v1397 = vadd.f32 %v1389, 1.0
      %v1398 = vadd.f32 %v1390, 1.0
      %v1399 = vadd.f32 %v1391, 1.0
      %v1400 = vadd.f32 %v1392, 1.0
      %v1401 = vadd.f32 %v1393, 1.0
      %v1402 = vadd.f32 %v1394, 1.0
      %v1403 = vadd.f32 %v1395, 1.0
      %v1404 = vmul.f32 %v1204, %v1396
      %v1405 = vmul.f32 %v1205, %v1397
      %v1406 = vmul.f32 %v1206, %v1398
      %v1407 = vmul.f32 %v1207, %v1399
      %v1408 = vmul.f32 %v1208, %v1400
      %v1409 = vmul.f32 %v1209, %v1401
      %v1410 = vmul.f32 %v1210, %v1402
      %v1411 = vmul.f32 %v1211, %v1403
      %v1412 = vsel %vm913, %v1404, 0.0
      %v1413 = vsel %vm913, %v1405, 0.0
      %v1414 = vadd.f32 %v1412, %v1413
      %v1415 = vsel %vm913, %v1406, 0.0
      %v1416 = vadd.f32 %v1414, %v1415
      %v1417 = vsel %vm913, %v1407, 0.0
      %v1418 = vadd.f32 %v1416, %v1417
      %v1419 = vsel %vm913, %v1408, 0.0
      %v1420 = vadd.f32 %v1418, %v1419
      %v1421 = vsel %vm913, %v1409, 0.0
      %v1422 = vadd.f32 %v1420, %v1421
      %v1423 = vsel %vm913, %v1410, 0.0
      %v1424 = vadd.f32 %v1422, %v1423
      %v1425 = vsel %vm913, %v1411, 0.0
      %v1426 = vadd.f32 %v1424, %v1425
      %v1427 = vrot.slane %v1426, 4
      %v1428 = vadd.f32 %v1426, %v1427
      %v1429 = vrot.slane %v1428, 2
      %v1430 = vadd.f32 %v1428, %v1429
      %v1431 = vrot.slane %v1430, 1
      %v1432 = vadd.f32 %v1430, %v1431
      %v1433 = vrcp.pop 64.0
      %v1434 = vmul.f32 %v1432, %v1433
      %v1435 = vld [vmem:[%s8] sm:$0xff]
      %v1436 = vld [vmem:[%s8 + $0x8] sm:$0xff]
      %v1437 = vld [vmem:[%s9] sm:$0x1]
      %v1439 = vsel %vm913, %v1434, 0
      %1441 = vmatprep.subr.mxu0 0.0
      %1442 = vmatpush1.msra.mxu0 %v1435
      %1443 = vmatprep.subr.mxu0 0.0
      %1444 = vmatpush1.msra.mxu0 %v1436
      %1445 = vmatprep.subr.mxu0 0.0
      %1446 = vmatpush1.msra.mxu0 0.0
      %1447 = vmatprep.subr.mxu0 0.0
      %1448 = vmatpush1.msra.mxu0 0.0
      %1449 = vmatprep.subr.mxu0 0.0
      %1450 = vmatpush1.msra.mxu0 0.0
      %1451 = vmatprep.subr.mxu0 0.0
      %1452 = vmatpush1.msra.mxu0 0.0
      %1453 = vmatprep.subr.mxu0 0.0
      %1454 = vmatpush1.msra.mxu0 0.0
      %1455 = vmatprep.subr.mxu0 0.0
      %1456 = vmatpush1.msra.mxu0 0.0
      %1457 = vmatprep.subr.mxu0 0.0
      %1458 = vmatpush1.msra.mxu0 0.0
      %1459 = vmatprep.subr.mxu0 0.0
      %1460 = vmatpush1.msra.mxu0 0.0
      %1461 = vmatprep.subr.mxu0 0.0
      %1462 = vmatpush1.msra.mxu0 0.0
      %1463 = vmatprep.subr.mxu0 0.0
      %1464 = vmatpush1.msra.mxu0 0.0
      %1465 = vmatprep.subr.mxu0 0.0
      %1466 = vmatpush1.msra.mxu0 0.0
      %1467 = vmatprep.subr.mxu0 0.0
      %1468 = vmatpush1.msra.mxu0 0.0
      %1469 = vmatprep.subr.mxu0 0.0
      %1470 = vmatpush1.msra.mxu0 0.0
      %1471 = vmatprep.subr.mxu0 0.0
      %1472 = vmatpush1.msra.mxu0 0.0
      %1473 = vmatprep.subr.mxu0 0.0
      %1474 = vmatpush1.msra.mxu0 0.0
      %1475 = vmatprep.subr.mxu0 0.0
      %1476 = vmatpush1.msra.mxu0 0.0
      %1477 = vmatprep.subr.mxu0 0.0
      %1478 = vmatpush1.msra.mxu0 0.0
      %1479 = vmatprep.subr.mxu0 0.0
      %1480 = vmatpush1.msra.mxu0 0.0
      %1481 = vmatprep.subr.mxu0 0.0
      %1482 = vmatpush1.msra.mxu0 0.0
      %1483 = vmatprep.subr.mxu0 0.0
      %1484 = vmatpush1.msra.mxu0 0.0
      %1485 = vmatprep.subr.mxu0 0.0
      %1486 = vmatpush1.msra.mxu0 0.0
      %1487 = vmatprep.subr.mxu0 0.0
      %1488 = vmatpush1.msra.mxu0 0.0
      %1489 = vmatprep.subr.mxu0 0.0
      %1490 = vmatpush1.msra.mxu0 0.0
      %1491 = vmatprep.subr.mxu0 0.0
      %1492 = vmatpush1.msra.mxu0 0.0
      %1493 = vmatprep.subr.mxu0 0.0
      %1494 = vmatpush1.msra.mxu0 0.0
      %1495 = vmatprep.subr.mxu0 0.0
      %1496 = vmatpush1.msra.mxu0 0.0
      %1497 = vmatprep.subr.mxu0 0.0
      %1498 = vmatpush1.msra.mxu0 0.0
      %1499 = vmatprep.subr.mxu0 0.0
      %1500 = vmatpush1.msra.mxu0 0.0
      %1501 = vmatprep.subr.mxu0 0.0
      %1502 = vmatpush1.msra.mxu0 0.0
      %1503 = vmatprep.subr.mxu0 0.0
      %1504 = vmatpush1.msra.mxu0 0.0
      %1505 = vmatprep.mubr.f32.mxu0 0.0
      %1506 = vmatmul.mubr.f32.gmra.mrb[0].mxu0 %v1439
      %v1507 = vpop.f32.mrb[0].mxu0
      %v1508 = vadd.f32 %v1437, %v1507
      %v1509 = vpop.f32.mrb[0].mxu0
      %1510 = vdwg.mxu0
      %v1511 = vmul.f32 %v1508, 0.5
      %v1512 = vmul.f32 %v1508, 0.70710677
      %vm1513 = vcmp.lt.f32.partialorder %v1512, 0.0
      %v1514 = vsel %vm1513, -1.0, 1.0
      %v1515 = vand.u32 2147483647, %v1512
      %v1516 = vmul.f32 %v1515, 0.3275911
      %v1517 = vadd.f32 %v1516, 1.0
      %v1518 = vrcp.pop %v1517
      %v1519 = vmul.f32 %v1518, 1.0614054
      %v1520 = vadd.f32 %v1519, -1.4531521
      %v1521 = vmul.f32 %v1520, %v1518
      %v1522 = vadd.f32 %v1521, 1.4214138
      %v1523 = vmul.f32 %v1522, %v1518
      %v1524 = vadd.f32 %v1523, -0.28449672
      %v1525 = vmul.f32 %v1524, %v1518
      %v1526 = vadd.f32 %v1525, 0.2548296
      %v1527 = vmul.f32 %v1526, %v1518
      %v1528 = vsub.f32 0.0, %v1515
      %v1529 = vmul.f32 %v1528, %v1515
      %v1530 = vmul.f32 %v1529, 1.442695
      %v1531 = vpow.pop %v1530
      %v1532 = vmul.f32 %v1527, %v1531
      %v1533 = vsub.f32 1.0, %v1532
      %v1534 = vmul.f32 %v1514, %v1533
      %v1535 = vadd.f32 %v1534, 1.0
      %v1536 = vmul.f32 %v1511, %v1535
      %v1537 = vld [vmem:[%s10] sm:$0xf]
      %v1538 = vld [vmem:[%s11] sm:$0x1]
      %v1540 = vsel %vm571, %v1536, 0
      %v1543 = vsel %vm596, %v1537, 0
      %1545 = vmatprep.subr.mxu0 0.0
      %1546 = vmatpush1.msra.mxu0 %v1543
      %1547 = vmatprep.subr.mxu0 0.0
      %1548 = vmatpush1.msra.mxu0 0.0
      %1549 = vmatprep.subr.mxu0 0.0
      %1550 = vmatpush1.msra.mxu0 0.0
      %1551 = vmatprep.subr.mxu0 0.0
      %1552 = vmatpush1.msra.mxu0 0.0
      %1553 = vmatprep.subr.mxu0 0.0
      %1554 = vmatpush1.msra.mxu0 0.0
      %1555 = vmatprep.subr.mxu0 0.0
      %1556 = vmatpush1.msra.mxu0 0.0
      %1557 = vmatprep.subr.mxu0 0.0
      %1558 = vmatpush1.msra.mxu0 0.0
      %1559 = vmatprep.subr.mxu0 0.0
      %1560 = vmatpush1.msra.mxu0 0.0
      %1561 = vmatprep.subr.mxu0 0.0
      %1562 = vmatpush1.msra.mxu0 0.0
      %1563 = vmatprep.subr.mxu0 0.0
      %1564 = vmatpush1.msra.mxu0 0.0
      %1565 = vmatprep.subr.mxu0 0.0
      %1566 = vmatpush1.msra.mxu0 0.0
      %1567 = vmatprep.subr.mxu0 0.0
      %1568 = vmatpush1.msra.mxu0 0.0
      %1569 = vmatprep.subr.mxu0 0.0
      %1570 = vmatpush1.msra.mxu0 0.0
      %1571 = vmatprep.subr.mxu0 0.0
      %1572 = vmatpush1.msra.mxu0 0.0
      %1573 = vmatprep.subr.mxu0 0.0
      %1574 = vmatpush1.msra.mxu0 0.0
      %1575 = vmatprep.subr.mxu0 0.0
      %1576 = vmatpush1.msra.mxu0 0.0
      %1577 = vmatprep.subr.mxu0 0.0
      %1578 = vmatpush1.msra.mxu0 0.0
      %1579 = vmatprep.subr.mxu0 0.0
      %1580 = vmatpush1.msra.mxu0 0.0
      %1581 = vmatprep.subr.mxu0 0.0
      %1582 = vmatpush1.msra.mxu0 0.0
      %1583 = vmatprep.subr.mxu0 0.0
      %1584 = vmatpush1.msra.mxu0 0.0
      %1585 = vmatprep.subr.mxu0 0.0
      %1586 = vmatpush1.msra.mxu0 0.0
      %1587 = vmatprep.subr.mxu0 0.0
      %1588 = vmatpush1.msra.mxu0 0.0
      %1589 = vmatprep.subr.mxu0 0.0
      %1590 = vmatpush1.msra.mxu0 0.0
      %1591 = vmatprep.subr.mxu0 0.0
      %1592 = vmatpush1.msra.mxu0 0.0
      %1593 = vmatprep.subr.mxu0 0.0
      %1594 = vmatpush1.msra.mxu0 0.0
      %1595 = vmatprep.subr.mxu0 0.0
      %1596 = vmatpush1.msra.mxu0 0.0
      %1597 = vmatprep.subr.mxu0 0.0
      %1598 = vmatpush1.msra.mxu0 0.0
      %1599 = vmatprep.subr.mxu0 0.0
      %1600 = vmatpush1.msra.mxu0 0.0
      %1601 = vmatprep.subr.mxu0 0.0
      %1602 = vmatpush1.msra.mxu0 0.0
      %1603 = vmatprep.subr.mxu0 0.0
      %1604 = vmatpush1.msra.mxu0 0.0
      %1605 = vmatprep.subr.mxu0 0.0
      %1606 = vmatpush1.msra.mxu0 0.0
      %1607 = vmatprep.subr.mxu0 0.0
      %1608 = vmatpush1.msra.mxu0 0.0
      %1609 = vmatprep.mubr.f32.mxu0 0.0
      %1610 = vmatmul.mubr.f32.gmra.mrb[0].mxu0 %v1540
      %v1611 = vpop.f32.mrb[0].mxu0
      %v1612 = vadd.f32 %v1538, %v1611
      %v1613 = vpop.f32.mrb[0].mxu0
      %1614 = vdwg.mxu0
      %v1615 = vsub.f32 0.0, %v1612
      %v1616 = vmul.f32 %v1615, 1.442695
      %v1617 = vpow.pop %v1616
      %v1618 = vadd.f32 %v1617, 1.0
      %v1619 = vrcp.pop %v1618
      %v1620 = vlaneseq
      %v1621 = vshrl.u32 %v1620, 7
      %v1622 = vsub.s32 0, %v1621
      %v1623 = vrot.slane %v1619, %v1622
      %v1624 = vmul.f32 %v1404, %v1623
      %v1625 = vmul.f32 %v1405, %v1623
      %v1626 = vmul.f32 %v1406, %v1623
      %v1627 = vmul.f32 %v1407, %v1623
      %v1628 = vmul.f32 %v1408, %v1623
      %v1629 = vmul.f32 %v1409, %v1623
      %v1630 = vmul.f32 %v1410, %v1623
      %v1631 = vmul.f32 %v1411, %v1623
      %v1632 = vld [vmem:[%s539] sm:$0xff]
      %v1633 = vld [vmem:[%s539 + $0x10] sm:$0xff]
      %v1634 = vld [vmem:[%s539 + $0x20] sm:$0xff]
      %v1635 = vld [vmem:[%s539 + $0x30] sm:$0xff]
      %v1636 = vld [vmem:[%s539 + $0x40] sm:$0xff]
      %v1637 = vld [vmem:[%s539 + $0x50] sm:$0xff]
      %v1638 = vld [vmem:[%s539 + $0x60] sm:$0xff]
      %v1639 = vld [vmem:[%s539 + $0x70] sm:$0xff]
      %v1640 = vld [vmem:[%s544] sm:$0xff]
      %v1641 = vld [vmem:[%s544 + $0x8] sm:$0xff]
      %v1642 = vld [vmem:[%s544 + $0x10] sm:$0xff]
      %v1643 = vld [vmem:[%s544 + $0x18] sm:$0xff]
      %v1644 = vld [vmem:[%s544 + $0x20] sm:$0xff]
      %v1645 = vld [vmem:[%s544 + $0x28] sm:$0xff]
      %v1646 = vld [vmem:[%s544 + $0x30] sm:$0xff]
      %v1647 = vld [vmem:[%s544 + $0x38] sm:$0xff]
      %v1648 = vld [vmem:[%s539 + $0x1] sm:$0xff]
      %v1649 = vld [vmem:[%s539 + $0x11] sm:$0xff]
      %v1650 = vld [vmem:[%s539 + $0x21] sm:$0xff]
      %v1651 = vld [vmem:[%s539 + $0x31] sm:$0xff]
      %v1652 = vld [vmem:[%s539 + $0x41] sm:$0xff]
      %v1653 = vld [vmem:[%s539 + $0x51] sm:$0xff]
      %v1654 = vld [vmem:[%s539 + $0x61] sm:$0xff]
      %v1655 = vld [vmem:[%s539 + $0x71] sm:$0xff]
      %v1656 = vld [vmem:[%s549] sm:$0xff]
      %v1657 = vld [vmem:[%s549 + $0x10] sm:$0xff]
      %v1658 = vld [vmem:[%s549 + $0x20] sm:$0xff]
      %v1659 = vld [vmem:[%s549 + $0x30] sm:$0xff]
      %v1660 = vld [vmem:[%s549 + $0x40] sm:$0xff]
      %v1661 = vld [vmem:[%s549 + $0x50] sm:$0xff]
      %v1662 = vld [vmem:[%s549 + $0x60] sm:$0xff]
      %v1663 = vld [vmem:[%s549 + $0x70] sm:$0xff]
      %v1664 = vld [vmem:[%s549 + $0x1] sm:$0xff]
      %v1665 = vld [vmem:[%s549 + $0x11] sm:$0xff]
      %v1666 = vld [vmem:[%s549 + $0x21] sm:$0xff]
      %v1667 = vld [vmem:[%s549 + $0x31] sm:$0xff]
      %v1668 = vld [vmem:[%s549 + $0x41] sm:$0xff]
      %v1669 = vld [vmem:[%s549 + $0x51] sm:$0xff]
      %v1670 = vld [vmem:[%s549 + $0x61] sm:$0xff]
      %v1671 = vld [vmem:[%s549 + $0x71] sm:$0xff]
      %s1672 = scalar_lea.vmem %s539, 16
      %v1673 = vld [vmem:[%s1672] sm:$0xff]
      %v1674 = vld [vmem:[%s1672 + $0x10] sm:$0xff]
      %v1675 = vld [vmem:[%s1672 + $0x20] sm:$0xff]
      %v1676 = vld [vmem:[%s1672 + $0x30] sm:$0xff]
      %v1677 = vld [vmem:[%s1672 + $0x40] sm:$0xff]
      %v1678 = vld [vmem:[%s1672 + $0x50] sm:$0xff]
      %v1679 = vld [vmem:[%s1672 + $0x60] sm:$0xff]
      %v1680 = vld [vmem:[%s1672 + $0x70] sm:$0xff]
      %s1681 = scalar_lea.vmem %s544, 8
      %v1682 = vld [vmem:[%s1681] sm:$0xff]
      %v1683 = vld [vmem:[%s1681 + $0x8] sm:$0xff]
      %v1684 = vld [vmem:[%s1681 + $0x10] sm:$0xff]
      %v1685 = vld [vmem:[%s1681 + $0x18] sm:$0xff]
      %v1686 = vld [vmem:[%s1681 + $0x20] sm:$0xff]
      %v1687 = vld [vmem:[%s1681 + $0x28] sm:$0xff]
      %v1688 = vld [vmem:[%s1681 + $0x30] sm:$0xff]
      %v1689 = vld [vmem:[%s1681 + $0x38] sm:$0xff]
      %v1690 = vld [vmem:[%s1672 + $0x1] sm:$0xff]
      %v1691 = vld [vmem:[%s1672 + $0x11] sm:$0xff]
      %v1692 = vld [vmem:[%s1672 + $0x21] sm:$0xff]
      %v1693 = vld [vmem:[%s1672 + $0x31] sm:$0xff]
      %v1694 = vld [vmem:[%s1672 + $0x41] sm:$0xff]
      %v1695 = vld [vmem:[%s1672 + $0x51] sm:$0xff]
      %v1696 = vld [vmem:[%s1672 + $0x61] sm:$0xff]
      %v1697 = vld [vmem:[%s1672 + $0x71] sm:$0xff]
      %v1698 = vmax.f32 %v1632, %v1640
      %v1699 = vmax.f32 %v1633, %v1641
      %v1700 = vmax.f32 %v1634, %v1642
      %v1701 = vmax.f32 %v1635, %v1643
      %v1702 = vmax.f32 %v1636, %v1644
      %v1703 = vmax.f32 %v1637, %v1645
      %v1704 = vmax.f32 %v1638, %v1646
      %v1705 = vmax.f32 %v1639, %v1647
      %v1706 = vmax.f32 %v1648, %v1656
      %v1707 = vmax.f32 %v1649, %v1657
      %v1708 = vmax.f32 %v1650, %v1658
      %v1709 = vmax.f32 %v1651, %v1659
      %v1710 = vmax.f32 %v1652, %v1660
      %v1711 = vmax.f32 %v1653, %v1661
      %v1712 = vmax.f32 %v1654, %v1662
      %v1713 = vmax.f32 %v1655, %v1663
      %v1714 = vmax.f32 %v555, %v1664
      %v1715 = vmax.f32 %v556, %v1665
      %v1716 = vmax.f32 %v557, %v1666
      %v1717 = vmax.f32 %v558, %v1667
      %v1718 = vmax.f32 %v559, %v1668
      %v1719 = vmax.f32 %v560, %v1669
      %v1720 = vmax.f32 %v561, %v1670
      %v1721 = vmax.f32 %v562, %v1671
      %v1722 = vmax.f32 %v1673, %v1682
      %v1723 = vmax.f32 %v1674, %v1683
      %v1724 = vmax.f32 %v1675, %v1684
      %v1725 = vmax.f32 %v1676, %v1685
      %v1726 = vmax.f32 %v1677, %v1686
      %v1727 = vmax.f32 %v1678, %v1687
      %v1728 = vmax.f32 %v1679, %v1688
      %v1729 = vmax.f32 %v1680, %v1689
      %v1730 = vmax.f32 %v1698, %v1706
      %v1731 = vmax.f32 %v1699, %v1707
      %v1732 = vmax.f32 %v1700, %v1708
      %v1733 = vmax.f32 %v1701, %v1709
      %v1734 = vmax.f32 %v1702, %v1710
      %v1735 = vmax.f32 %v1703, %v1711
      %v1736 = vmax.f32 %v1704, %v1712
      %v1737 = vmax.f32 %v1705, %v1713
      %v1738 = vmax.f32 %v1714, %v1722
      %v1739 = vmax.f32 %v1715, %v1723
      %v1740 = vmax.f32 %v1716, %v1724
      %v1741 = vmax.f32 %v1717, %v1725
      %v1742 = vmax.f32 %v1718, %v1726
      %v1743 = vmax.f32 %v1719, %v1727
      %v1744 = vmax.f32 %v1720, %v1728
      %v1745 = vmax.f32 %v1721, %v1729
      %v1746 = vmax.f32 %v1730, %v1738
      %v1747 = vmax.f32 %v1731, %v1739
      %v1748 = vmax.f32 %v1732, %v1740
      %v1749 = vmax.f32 %v1733, %v1741
      %v1750 = vmax.f32 %v1734, %v1742
      %v1751 = vmax.f32 %v1735, %v1743
      %v1752 = vmax.f32 %v1736, %v1744
      %v1753 = vmax.f32 %v1737, %v1745
      %v1754 = vmax.f32 %v1746, %v1690
      %v1755 = vmax.f32 %v1747, %v1691
      %v1756 = vmax.f32 %v1748, %v1692
      %v1757 = vmax.f32 %v1749, %v1693
      %v1758 = vmax.f32 %v1750, %v1694
      %v1759 = vmax.f32 %v1751, %v1695
      %v1760 = vmax.f32 %v1752, %v1696
      %v1761 = vmax.f32 %v1753, %v1697
      %v1762 = vld [vmem:[%s12] sm:$0xff]
      %v1763 = vld [vmem:[%s12 + $0x8] sm:$0xff]
      %v1764 = vld [vmem:[%s13] sm:$0xf]
      %v1766 = vsel %vm571, %v1754, 0
      %v1769 = vsel %vm571, %v1755, 0
      %v1772 = vsel %vm571, %v1756, 0
      %v1775 = vsel %vm571, %v1757, 0
      %v1778 = vsel %vm571, %v1758, 0
      %v1781 = vsel %vm571, %v1759, 0
      %v1784 = vsel %vm571, %v1760, 0
      %v1787 = vsel %vm571, %v1761, 0
      %v1790 = vsel %vm596, %v1764, 0
      %1792 = vmatprep.subr.mxu0 0.0
      %1793 = vmatpush1.msra.mxu0 %v1790
      %1794 = vmatprep.subr.mxu0 0.0
      %1795 = vmatpush1.msra.mxu0 0.0
      %1796 = vmatprep.subr.mxu0 0.0
      %1797 = vmatpush1.msra.mxu0 0.0
      %1798 = vmatprep.subr.mxu0 0.0
      %1799 = vmatpush1.msra.mxu0 0.0
      %1800 = vmatprep.subr.mxu0 0.0
      %1801 = vmatpush1.msra.mxu0 0.0
      %1802 = vmatprep.subr.mxu0 0.0
      %1803 = vmatpush1.msra.mxu0 0.0
      %1804 = vmatprep.subr.mxu0 0.0
      %1805 = vmatpush1.msra.mxu0 0.0
      %1806 = vmatprep.subr.mxu0 0.0
      %1807 = vmatpush1.msra.mxu0 0.0
      %1808 = vmatprep.subr.mxu0 0.0
      %1809 = vmatpush1.msra.mxu0 0.0
      %1810 = vmatprep.subr.mxu0 0.0
      %1811 = vmatpush1.msra.mxu0 0.0
      %1812 = vmatprep.subr.mxu0 0.0
      %1813 = vmatpush1.msra.mxu0 0.0
      %1814 = vmatprep.subr.mxu0 0.0
      %1815 = vmatpush1.msra.mxu0 0.0
      %1816 = vmatprep.subr.mxu0 0.0
      %1817 = vmatpush1.msra.mxu0 0.0
      %1818 = vmatprep.subr.mxu0 0.0
      %1819 = vmatpush1.msra.mxu0 0.0
      %1820 = vmatprep.subr.mxu0 0.0
      %1821 = vmatpush1.msra.mxu0 0.0
      %1822 = vmatprep.subr.mxu0 0.0
      %1823 = vmatpush1.msra.mxu0 0.0
      %1824 = vmatprep.subr.mxu0 0.0
      %1825 = vmatpush1.msra.mxu0 0.0
      %1826 = vmatprep.subr.mxu0 0.0
      %1827 = vmatpush1.msra.mxu0 0.0
      %1828 = vmatprep.subr.mxu0 0.0
      %1829 = vmatpush1.msra.mxu0 0.0
      %1830 = vmatprep.subr.mxu0 0.0
      %1831 = vmatpush1.msra.mxu0 0.0
      %1832 = vmatprep.subr.mxu0 0.0
      %1833 = vmatpush1.msra.mxu0 0.0
      %1834 = vmatprep.subr.mxu0 0.0
      %1835 = vmatpush1.msra.mxu0 0.0
      %1836 = vmatprep.subr.mxu0 0.0
      %1837 = vmatpush1.msra.mxu0 0.0
      %1838 = vmatprep.subr.mxu0 0.0
      %1839 = vmatpush1.msra.mxu0 0.0
      %1840 = vmatprep.subr.mxu0 0.0
      %1841 = vmatpush1.msra.mxu0 0.0
      %1842 = vmatprep.subr.mxu0 0.0
      %1843 = vmatpush1.msra.mxu0 0.0
      %1844 = vmatprep.subr.mxu0 0.0
      %1845 = vmatpush1.msra.mxu0 0.0
      %1846 = vmatprep.subr.mxu0 0.0
      %1847 = vmatpush1.msra.mxu0 0.0
      %1848 = vmatprep.subr.mxu0 0.0
      %1849 = vmatpush1.msra.mxu0 0.0
      %1850 = vmatprep.subr.mxu0 0.0
      %1851 = vmatpush1.msra.mxu0 0.0
      %1852 = vmatprep.subr.mxu0 0.0
      %1853 = vmatpush1.msra.mxu0 0.0
      %1854 = vmatprep.subr.mxu0 0.0
      %1855 = vmatpush1.msra.mxu0 0.0
      %1856 = vmatprep.mubr.f32.mxu0 0.0
      %1857 = vmatmul.mubr.f32.gmra.mrb[0].mxu0 %v1766
      %v1858 = vpop.f32.mrb[0].mxu0
      %v1859 = vadd.f32 0.0, %v1858
      %v1860 = vpop.f32.mrb[0].mxu0
      %1861 = vmatprep.mubr.f32.mxu0 0.0
      %1862 = vmatmul.mubr.f32.gmra.mrb[0].mxu0 %v1769
      %v1863 = vpop.f32.mrb[0].mxu0
      %v1864 = vadd.f32 0.0, %v1863
      %v1865 = vpop.f32.mrb[0].mxu0
      %1866 = vmatprep.mubr.f32.mxu0 0.0
      %1867 = vmatmul.mubr.f32.gmra.mrb[0].mxu0 %v1772
      %v1868 = vpop.f32.mrb[0].mxu0
      %v1869 = vadd.f32 0.0, %v1868
      %v1870 = vpop.f32.mrb[0].mxu0
      %1871 = vmatprep.mubr.f32.mxu0 0.0
      %1872 = vmatmul.mubr.f32.gmra.mrb[0].mxu0 %v1775
      %v1873 = vpop.f32.mrb[0].mxu0
      %v1874 = vadd.f32 0.0, %v1873
      %v1875 = vpop.f32.mrb[0].mxu0
      %1876 = vmatprep.mubr.f32.mxu0 0.0
      %1877 = vmatmul.mubr.f32.gmra.mrb[0].mxu0 %v1778
      %v1878 = vpop.f32.mrb[0].mxu0
      %v1879 = vadd.f32 0.0, %v1878
      %v1880 = vpop.f32.mrb[0].mxu0
      %1881 = vmatprep.mubr.f32.mxu0 0.0
      %1882 = vmatmul.mubr.f32.gmra.mrb[0].mxu0 %v1781
      %v1883 = vpop.f32.mrb[0].mxu0
      %v1884 = vadd.f32 0.0, %v1883
      %v1885 = vpop.f32.mrb[0].mxu0
      %1886 = vmatprep.mubr.f32.mxu0 0.0
      %1887 = vmatmul.mubr.f32.gmra.mrb[0].mxu0 %v1784
      %v1888 = vpop.f32.mrb[0].mxu0
      %v1889 = vadd.f32 0.0, %v1888
      %v1890 = vpop.f32.mrb[0].mxu0
      %1891 = vmatprep.mubr.f32.mxu0 0.0
      %1892 = vmatmul.mubr.f32.gmra.mrb[0].mxu0 %v1787
      %v1893 = vpop.f32.mrb[0].mxu0
      %v1894 = vadd.f32 0.0, %v1893
      %v1895 = vpop.f32.mrb[0].mxu0
      %1896 = vdwg.mxu0
      %v1898 = vsel %vm913, %v1624, 0
      %v1901 = vsel %vm913, %v1625, 0
      %v1904 = vsel %vm913, %v1626, 0
      %v1907 = vsel %vm913, %v1627, 0
      %v1910 = vsel %vm913, %v1628, 0
      %v1913 = vsel %vm913, %v1629, 0
      %v1916 = vsel %vm913, %v1630, 0
      %v1919 = vsel %vm913, %v1631, 0
      %1921 = vmatprep.subr.mxu0 0.0
      %1922 = vmatpush1.msra.mxu0 %v1762
      %1923 = vmatprep.subr.mxu0 0.0
      %1924 = vmatpush1.msra.mxu0 %v1763
      %1925 = vmatprep.subr.mxu0 0.0
      %1926 = vmatpush1.msra.mxu0 0.0
      %1927 = vmatprep.subr.mxu0 0.0
      %1928 = vmatpush1.msra.mxu0 0.0
      %1929 = vmatprep.subr.mxu0 0.0
      %1930 = vmatpush1.msra.mxu0 0.0
      %1931 = vmatprep.subr.mxu0 0.0
      %1932 = vmatpush1.msra.mxu0 0.0
      %1933 = vmatprep.subr.mxu0 0.0
      %1934 = vmatpush1.msra.mxu0 0.0
      %1935 = vmatprep.subr.mxu0 0.0
      %1936 = vmatpush1.msra.mxu0 0.0
      %1937 = vmatprep.subr.mxu0 0.0
      %1938 = vmatpush1.msra.mxu0 0.0
      %1939 = vmatprep.subr.mxu0 0.0
      %1940 = vmatpush1.msra.mxu0 0.0
      %1941 = vmatprep.subr.mxu0 0.0
      %1942 = vmatpush1.msra.mxu0 0.0
      %1943 = vmatprep.subr.mxu0 0.0
      %1944 = vmatpush1.msra.mxu0 0.0
      %1945 = vmatprep.subr.mxu0 0.0
      %1946 = vmatpush1.msra.mxu0 0.0
      %1947 = vmatprep.subr.mxu0 0.0
      %1948 = vmatpush1.msra.mxu0 0.0
      %1949 = vmatprep.subr.mxu0 0.0
      %1950 = vmatpush1.msra.mxu0 0.0
      %1951 = vmatprep.subr.mxu0 0.0
      %1952 = vmatpush1.msra.mxu0 0.0
      %1953 = vmatprep.subr.mxu0 0.0
      %1954 = vmatpush1.msra.mxu0 0.0
      %1955 = vmatprep.subr.mxu0 0.0
      %1956 = vmatpush1.msra.mxu0 0.0
      %1957 = vmatprep.subr.mxu0 0.0
      %1958 = vmatpush1.msra.mxu0 0.0
      %1959 = vmatprep.subr.mxu0 0.0
      %1960 = vmatpush1.msra.mxu0 0.0
      %1961 = vmatprep.subr.mxu0 0.0
      %1962 = vmatpush1.msra.mxu0 0.0
      %1963 = vmatprep.subr.mxu0 0.0
      %1964 = vmatpush1.msra.mxu0 0.0
      %1965 = vmatprep.subr.mxu0 0.0
      %1966 = vmatpush1.msra.mxu0 0.0
      %1967 = vmatprep.subr.mxu0 0.0
      %1968 = vmatpush1.msra.mxu0 0.0
      %1969 = vmatprep.subr.mxu0 0.0
      %1970 = vmatpush1.msra.mxu0 0.0
      %1971 = vmatprep.subr.mxu0 0.0
      %1972 = vmatpush1.msra.mxu0 0.0
      %1973 = vmatprep.subr.mxu0 0.0
      %1974 = vmatpush1.msra.mxu0 0.0
      %1975 = vmatprep.subr.mxu0 0.0
      %1976 = vmatpush1.msra.mxu0 0.0
      %1977 = vmatprep.subr.mxu0 0.0
      %1978 = vmatpush1.msra.mxu0 0.0
      %1979 = vmatprep.subr.mxu0 0.0
      %1980 = vmatpush1.msra.mxu0 0.0
      %1981 = vmatprep.subr.mxu0 0.0
      %1982 = vmatpush1.msra.mxu0 0.0
      %1983 = vmatprep.subr.mxu0 0.0
      %1984 = vmatpush1.msra.mxu0 0.0
      %1985 = vmatprep.mubr.f32.mxu0 0.0
      %1986 = vmatmul.mubr.f32.gmra.mrb[0].mxu0 %v1898
      %v1987 = vpop.f32.mrb[0].mxu0
      %v1988 = vadd.f32 %v1859, %v1987
      %v1989 = vpop.f32.mrb[0].mxu0
      %1990 = vmatprep.mubr.f32.mxu0 0.0
      %1991 = vmatmul.mubr.f32.gmra.mrb[0].mxu0 %v1901
      %v1992 = vpop.f32.mrb[0].mxu0
      %v1993 = vadd.f32 %v1864, %v1992
      %v1994 = vpop.f32.mrb[0].mxu0
      %1995 = vmatprep.mubr.f32.mxu0 0.0
      %1996 = vmatmul.mubr.f32.gmra.mrb[0].mxu0 %v1904
      %v1997 = vpop.f32.mrb[0].mxu0
      %v1998 = vadd.f32 %v1869, %v1997
      %v1999 = vpop.f32.mrb[0].mxu0
      %2000 = vmatprep.mubr.f32.mxu0 0.0
      %2001 = vmatmul.mubr.f32.gmra.mrb[0].mxu0 %v1907
      %v2002 = vpop.f32.mrb[0].mxu0
      %v2003 = vadd.f32 %v1874, %v2002
      %v2004 = vpop.f32.mrb[0].mxu0
      %2005 = vmatprep.mubr.f32.mxu0 0.0
      %2006 = vmatmul.mubr.f32.gmra.mrb[0].mxu0 %v1910
      %v2007 = vpop.f32.mrb[0].mxu0
      %v2008 = vadd.f32 %v1879, %v2007
      %v2009 = vpop.f32.mrb[0].mxu0
      %2010 = vmatprep.mubr.f32.mxu0 0.0
      %2011 = vmatmul.mubr.f32.gmra.mrb[0].mxu0 %v1913
      %v2012 = vpop.f32.mrb[0].mxu0
      %v2013 = vadd.f32 %v1884, %v2012
      %v2014 = vpop.f32.mrb[0].mxu0
      %2015 = vmatprep.mubr.f32.mxu0 0.0
      %2016 = vmatmul.mubr.f32.gmra.mrb[0].mxu0 %v1916
      %v2017 = vpop.f32.mrb[0].mxu0
      %v2018 = vadd.f32 %v1889, %v2017
      %v2019 = vpop.f32.mrb[0].mxu0
      %2020 = vmatprep.mubr.f32.mxu0 0.0
      %2021 = vmatmul.mubr.f32.gmra.mrb[0].mxu0 %v1919
      %v2022 = vpop.f32.mrb[0].mxu0
      %v2023 = vadd.f32 %v1894, %v2022
      %v2024 = vpop.f32.mrb[0].mxu0
      %2025 = vdwg.mxu0
      %v2026 = vld [vmem:[%s14] sm:$0x1]
      %v2028 = vlaneseq
      %v2029 = vshrl.u32 %v2028, 7
      %v2030 = vsub.s32 0, %v2029
      %v2031 = vrot.slane %v2026, %v2030
      %v2033 = vadd.f32 %v1988, %v2031
      %v2034 = vadd.f32 %v1993, %v2031
      %v2035 = vadd.f32 %v1998, %v2031
      %v2036 = vadd.f32 %v2003, %v2031
      %v2037 = vadd.f32 %v2008, %v2031
      %v2038 = vadd.f32 %v2013, %v2031
      %v2039 = vadd.f32 %v2018, %v2031
      %v2040 = vadd.f32 %v2023, %v2031
      %vm2041 = vcmask 64512
      %2042 = vst.msk [vmem:[%s554] sm:$0xff] %vm2041, %v2033
      %2043 = vst.msk [vmem:[%s554 + $0x8] sm:$0xff] %vm2041, %v2034
      %2044 = vst.msk [vmem:[%s554 + $0x10] sm:$0xff] %vm2041, %v2035
      %2045 = vst.msk [vmem:[%s554 + $0x18] sm:$0xff] %vm2041, %v2036
      %2046 = vst.msk [vmem:[%s554 + $0x20] sm:$0xff] %vm2041, %v2037
      %2047 = vst.msk [vmem:[%s554 + $0x28] sm:$0xff] %vm2041, %v2038
      %2048 = vst.msk [vmem:[%s554 + $0x30] sm:$0xff] %vm2041, %v2039
      %2049 = vst.msk [vmem:[%s554 + $0x38] sm:$0xff] %vm2041, %v2040
      %p2050 = scmp.lt.s32.totalorder %s26, 1
      %s2051 = scalar_select %p2050, %s26, 1
      %s2052 = smul.addr %s2051, 8
      %s2053 = smul.addr %s2052, 8
      %s2054 = scalar_lea.vmem %s15, %s2053
      // Predicated region
      $region81: #{mbconv_forward.1} parent=79 // pred_check
        %p2055 = pneg %p379
      $region82: #{mbconv_forward.1} parent=79 // pred_check_branch
        %2057 = sbr.rel (%p2055) target = $region84
      $region83: #{mbconv_forward.1} parent=79 // pred_region
        _
      $region84: #{mbconv_forward.1} parent=79 // pred_fallthru
        _
    $region80: #{mbconv_forward.1} parent=5 // pred_fallthru
      _
    %p2058 = scmp.le.s32.totalorder 2, %s21
    // Predicated region
    $region85: #{mbconv_forward.1} parent=5 // pred_check
      %p2059 = pneg %p2058
    $region86: #{mbconv_forward.1} parent=5 // pred_check_branch
      %2061 = sbr.rel (%p2059) target = $region88
    $region87: #{mbconv_forward.1} parent=5 // pred_region
      %s2062 = ssub.s32 %s21, 2
      // Predicated region
      $region89: #{mbconv_forward.1} parent=87 // pred_check
        %p2063 = pneg %p385
      $region90: #{mbconv_forward.1} parent=87 // pred_check_branch
        %2065 = sbr.rel (%p2063) target = $region92
      $region91: #{mbconv_forward.1} parent=87 // pred_region
        %p2066 = scmp.lt.s32.totalorder %s27, 1
        %s2067 = scalar_select %p2066, %s27, 1
        %s2068 = smul.addr %s2067, 8
        %s2069 = smul.addr %s2068, 8
        %s2070 = scalar_lea.vmem %s15, %s2069
      $region92: #{mbconv_forward.1} parent=87 // pred_fallthru
        _
    $region88: #{mbconv_forward.1} parent=5 // pred_fallthru
      _
  $region6: #{mbconv_forward.1} parent=0 // loop_footer
    %s25 = sadd.s32 1, %s21
  $region7: #{mbconv_forward.1} parent=0 // loop_footer_branch
    %20 = sbr.rel target = $region3
  $region8: #{mbconv_forward.1} parent=0 // loop_exit
    _

</llo_original>
